<compile_context>
chip_gen: v5e
topology: v5e:2x2
jax: 0.10.0
libtpu: 0.0.40
codegen_flags: <defaults>
</compile_context>

<pallas_src>
import jax
import jax.numpy as jnp
from jax import lax
from jax.experimental import pallas as pl
from jax.experimental.pallas import tpu as pltpu


# ----------------------------------------------------------------------------
# Pallas kernel: one batch per grid step; static unrolled loop over parts.
# Folded-canonicalization PointNet encoder + own-part rotation head + masked
# reduction + per-point rtvec -> SO(3) projection (fused, no SVD).
# ----------------------------------------------------------------------------
def _make_kernel(num_parts, rot_dim, sym):
    eps2 = 1e-12  # rsqrt(max(s, eps^2)) == 1 / max(sqrt(s), eps) with eps = 1e-6

    def kernel(x_ref, lab_ref, ab_ref, w2_ref, b2_ref, w3a_ref, w3b_ref, b3_ref,
               wh_ref, bh_ref, rot_ref, wsum_ref):
        x = x_ref[0]                       # (3, N) f32 camera points for this batch
        lab = lab_ref[0]                   # (1, N) int32 labels
        w2 = w2_ref[...]                   # (128, 64) bf16 (resident)
        b2 = b2_ref[...]                   # (128, 1)  f32
        w3a = w3a_ref[...]                 # (128, 128) bf16
        w3b = w3b_ref[...]                 # (128, 128) bf16
        b3 = b3_ref[...]                   # (128, 1)  f32

        for p in range(num_parts):         # static unroll (P is small)
            # ---- layer 1 with folded canonicalization (kept in f32, K=3) -----
            ab = ab_ref[0, p]                               # (64, 4) f32
            a = ab[:, 0:3]                                  # folded W1'
            b1 = ab[:, 3:4]                                 # folded b1'
            h = jnp.maximum(
                jnp.dot(a, x, preferred_element_type=jnp.float32) + b1, 0.0)
            hb = h.astype(jnp.bfloat16)                     # (64, N)

            # ---- PointNet-style shared MLP encoder ---------------------------
            # TODO(synk): exact CaptraRotNetPointNet2 (PointNet++ set abstraction)
            # source is not provided; substituted per-point MLP + global max-pool.
            h2 = jnp.maximum(
                jnp.dot(w2, hb, preferred_element_type=jnp.float32) + b2, 0.0)
            g = jnp.max(h2, axis=-1, keepdims=True)         # (128, 1) global feat
            feat = jnp.maximum(
                jnp.dot(w3a, h2.astype(jnp.bfloat16),
                        preferred_element_type=jnp.float32)
                + jnp.dot(w3b, g.astype(jnp.bfloat16),
                          preferred_element_type=jnp.float32)
                + b3, 0.0)
            featb = feat.astype(jnp.bfloat16)               # (128, N)

            # ---- own-part rotation head (only diagonal [b,p,p] is ever used) --
            # TODO(synk): exact RotationRegressor source is not provided;
            # substituted per-part linear heads on the point features.
            raw = (jnp.dot(wh_ref[p], featb, preferred_element_type=jnp.float32)
                   + bh_ref[p])                             # (rot_dim, N) f32

            # ---- own-part masked reduction over points ------------------------
            m = (lab == p).astype(jnp.float32)              # (1, N)
            wsum_ref[0, p] = jnp.sum(raw * m, axis=-1, keepdims=True)

            # ---- per-point rtvec -> SO(3), vectorized on (3,N) slabs ----------
            # TODO(synk): exact CAPTRA convert_pred_rtvec_to_matrix source is not
            # provided; non-sym uses row-wise Gram-Schmidt, sym builds a frame
            # around the predicted axis.
            if sym:
                v = raw[0:3]
                y = v * lax.rsqrt(jnp.maximum(
                    jnp.sum(v * v, axis=0, keepdims=True), eps2))
                yx, yy, yz = y[0:1], y[1:2], y[2:3]
                cond = jnp.abs(yx) > 0.9
                refx = jnp.where(cond, 0.0, 1.0)
                refz = jnp.where(cond, 1.0, 0.0)
                zx = -(refz * yy)                           # cross(ref, y)
                zy = refz * yx - refx * yz
                zz = refx * yy
                invz = lax.rsqrt(jnp.maximum(zx * zx + zy * zy + zz * zz, eps2))
                zx, zy, zz = zx * invz, zy * invz, zz * invz
                xx = yy * zz - yz * zy                      # cross(y, z)
                xy = yz * zx - yx * zz
                xz = yx * zy - yy * zx
                # R columns = [x, y, z]; row-major rows written directly.
                rot_ref[0, p, 0:1, :] = xx
                rot_ref[0, p, 1:2, :] = yx
                rot_ref[0, p, 2:3, :] = zx
                rot_ref[0, p, 3:4, :] = xy
                rot_ref[0, p, 4:5, :] = yy
                rot_ref[0, p, 5:6, :] = zy
                rot_ref[0, p, 6:7, :] = xz
                rot_ref[0, p, 7:8, :] = yz
                rot_ref[0, p, 8:9, :] = zz
            else:
                r0 = raw[0:3]                               # (3, N)
                r1 = raw[3:6]                               # (3, N)
                inv0 = lax.rsqrt(jnp.maximum(
                    jnp.sum(r0 * r0, axis=0, keepdims=True), eps2))
                b0 = r0 * inv0
                d = jnp.sum(b0 * r1, axis=0, keepdims=True)
                u1 = r1 - d * b0
                inv1 = lax.rsqrt(jnp.maximum(
                    jnp.sum(u1 * u1, axis=0, keepdims=True), eps2))
                c1 = u1 * inv1
                b0x, b0y, b0z = b0[0:1], b0[1:2], b0[2:3]
                c1x, c1y, c1z = c1[0:1], c1[1:2], c1[2:3]
                # R rows = [b0; c1; b0 x c1]; direct sub-slice stores (no concat).
                rot_ref[0, p, 0:3, :] = b0
                rot_ref[0, p, 3:6, :] = c1
                rot_ref[0, p, 6:7, :] = b0y * c1z - b0z * c1y
                rot_ref[0, p, 7:8, :] = b0z * c1x - b0x * c1z
                rot_ref[0, p, 8:9, :] = b0x * c1y - b0y * c1x

    return kernel


def run_backbone_kernel(points, labels3, ab, w2, b2, w3a, w3b, b3, whp, bhp,
                        num_parts, rot_dim, sym):
    B, _, N = points.shape
    P = num_parts
    # NOTE: N is processed as a single lane-resident block; for N not a
    # multiple of 128 the max-pool / mask sums would need an iota mask.
    kernel = _make_kernel(P, rot_dim, sym)

    per_b3 = lambda i: (i, 0, 0)
    per_b4 = lambda i: (i, 0, 0, 0)
    const2 = lambda i: (0, 0)
    const3 = lambda i: (0, 0, 0)

    in_specs = [
        pl.BlockSpec((1, 3, N), per_b3),          # camera points (f32)
        pl.BlockSpec((1, 1, N), per_b3),          # labels (int32)
        pl.BlockSpec((1, P, 64, 4), per_b4),      # packed folded W1' | b1'
        pl.BlockSpec(w2.shape, const2),           # resident weights below
        pl.BlockSpec(b2.shape, const2),
        pl.BlockSpec(w3a.shape, const2),
        pl.BlockSpec(w3b.shape, const2),
        pl.BlockSpec(b3.shape, const2),
        pl.BlockSpec(whp.shape, const3),          # per-part head W (resident)
        pl.BlockSpec(bhp.shape, const3),          # per-part head b (resident)
    ]
    out_shape = (
        jax.ShapeDtypeStruct((B, P, 9, N), jnp.float32),        # per-point rotations (flat 3x3)
        jax.ShapeDtypeStruct((B, P, rot_dim, 1), jnp.float32),  # own-part masked sums
    )
    out_specs = (
        pl.BlockSpec((1, P, 9, N), per_b4),
        pl.BlockSpec((1, P, rot_dim, 1), per_b4),
    )
    return pl.pallas_call(
        kernel,
        out_shape=out_shape,
        grid=(B,),
        in_specs=in_specs,
        out_specs=out_specs,
        compiler_params=pltpu.CompilerParams(dimension_semantics=("parallel",)),
    )(points, labels3, ab, w2, b2, w3a, w3b, b3, whp, bhp)


# ----------------------------------------------------------------------------
# Plain-JAX glue (tiny per-part 3x3 work only).
# ----------------------------------------------------------------------------
def convert_pred_rtvec_to_matrix(rtvec, sym):
    # TODO(synk): exact CAPTRA convert_pred_rtvec_to_matrix source is not
    # provided; non-sym uses row-wise Gram-Schmidt of the 9D vector (matches
    # the in-kernel projection), sym builds a frame around the predicted axis.
    eps = 1e-6
    if sym:
        y = rtvec / jnp.maximum(jnp.linalg.norm(rtvec, axis=-1, keepdims=True), eps)
        cond = jnp.abs(y[..., :1]) > 0.9
        ref = jnp.where(cond,
                        jnp.broadcast_to(jnp.array([0., 0., 1.], jnp.float32), y.shape),
                        jnp.broadcast_to(jnp.array([1., 0., 0.], jnp.float32), y.shape))
        z = jnp.cross(ref, y)
        z = z / jnp.maximum(jnp.linalg.norm(z, axis=-1, keepdims=True), eps)
        x = jnp.cross(y, z)
        return jnp.stack([x, y, z], axis=-1)
    M = rtvec.reshape(rtvec.shape[:-1] + (3, 3))
    r0, r1 = M[..., 0, :], M[..., 1, :]
    b0 = r0 / jnp.maximum(jnp.linalg.norm(r0, axis=-1, keepdims=True), eps)
    d = jnp.sum(b0 * r1, axis=-1, keepdims=True)
    u1 = r1 - d * b0
    b1 = u1 / jnp.maximum(jnp.linalg.norm(u1, axis=-1, keepdims=True), eps)
    b2 = jnp.cross(b0, b1)
    return jnp.stack([b0, b1, b2], axis=-2)


def part_canon_net_forward(inp, params, obj_cfg, backbone_out_dim=128):
    """Equivalent of PartCanonNet.forward with network_type='rot'."""
    num_parts = obj_cfg['num_parts']
    sym = obj_cfg['sym']
    rot_dim = 3 if sym else 9
    P = num_parts

    points = inp['points']              # (B, 3, N)
    points_mean = inp['points_mean']    # (B, 3, 1)
    labels = inp['labels']              # (B, N) int
    part_pose = inp['state']['part']

    B, _, N = points.shape
    BP = B * P

    # canon_pose = part_pose reshaped to (B*P, ...)
    canon_rot = part_pose['rotation'].reshape((BP, 3, 3))
    canon_trans = part_pose['translation'].reshape((BP, 3, 1))
    canon_scale = part_pose['scale'].reshape((BP, 1, 1))

    # Fold the canonicalization R^T @ (x + mean - t) / s into layer 1, then pack
    # the folded per-(batch,part) weight and bias into one (B, P, 64, 4) slab.
    Rt = jnp.swapaxes(canon_rot, -1, -2)
    w1, b1 = params['w1'], params['b1']
    a_eff = jnp.einsum('oc,bcd->bod', w1, Rt) / canon_scale                # (BP, 64, 3)
    mean_bp = jnp.repeat(points_mean, P, axis=0)                           # (BP, 3, 1)
    shift = jnp.matmul(Rt, mean_bp - canon_trans) / canon_scale            # (BP, 3, 1)
    b1_eff = b1[None] + jnp.einsum('oc,bcd->bod', w1, shift)               # (BP, 64, 1)
    ab = jnp.concatenate([a_eff, b1_eff], axis=-1).reshape(B, P, 64, 4)
    ab = ab.astype(jnp.float32)

    # Split w3 (kills the (256,N) concat) and reshape the head per part.
    c2 = backbone_out_dim
    w3 = params['w3']
    w3a = w3[:, :c2].astype(jnp.bfloat16)
    w3b = w3[:, c2:].astype(jnp.bfloat16)
    whp = params['wh'].reshape(P, rot_dim, c2).astype(jnp.bfloat16)
    bhp = params['bh'].reshape(P, rot_dim, 1)

    labels3 = labels.astype(jnp.int32)[:, None, :]                         # (B, 1, N)

    rot_flat, wsum = run_backbone_kernel(
        points.astype(jnp.float32), labels3, ab,
        params['w2'].astype(jnp.bfloat16), params['b2'],
        w3a, w3b, params['b3'], whp, bhp,
        num_parts, rot_dim, sym)

    # own-part weighted rtvec -> rotation (only the [:, idx, idx] diagonal of the
    # reference computation ever reaches the output, so only it is computed).
    msum = (labels[:, None, :] ==
            jnp.arange(P, dtype=labels.dtype)[None, :, None]).sum(-1).astype(jnp.float32)  # (B, P)
    weighted = wsum[..., 0] / jnp.maximum(msum, 1.0)[..., None]            # (B, P, rot_dim)
    valid = (msum > 0).astype(jnp.float32)[..., None]
    if sym:
        default = jnp.array([0., 1., 0.], jnp.float32)
    else:
        default = jnp.eye(3, dtype=jnp.float32).reshape(-1)
    rtvec = valid * weighted + (1.0 - valid) * default[None, None, :]
    part_rot = convert_pred_rtvec_to_matrix(rtvec, sym)                    # (B, P, 3, 3)

    # Per-point rotations were projected inside the kernel: (B,P,9,N) -> (B,P,N,3,3).
    # NOTE(perf): a downstream consumer could use the channel-first (B,P,3,3,N)
    # layout directly and avoid this HBM transpose; kept here to preserve the
    # original module's output layout.
    point_rotation = jnp.moveaxis(rot_flat.reshape(B, P, 3, 3, N), -1, 2)

    # merge_reenact_canon_part_pose
    # TODO(synk): exact merge_reenact_canon_part_pose source is not provided;
    # compose predicted canonical-frame rotation with the tracked part pose.
    final_pose = {
        'rotation': jnp.matmul(part_pose['rotation'], part_rot),
        # type == 'rot': translation / scale taken from gt_part
        'translation': inp['gt_part']['translation'],
        'scale': inp['gt_part']['scale'],
    }
    return {'part': final_pose, 'point_rotation': point_rotation}


# ----------------------------------------------------------------------------
# Deterministic synthetic parameters / inputs.
# ----------------------------------------------------------------------------
def init_params(key, num_parts, rot_dim, backbone_out_dim=128):
    c1 = 64
    c2 = backbone_out_dim
    ks = jax.random.split(key, 4)
    return {
        'w1': jax.random.normal(ks[0], (c1, 3), jnp.float32) * 0.5,
        'b1': jnp.zeros((c1, 1), jnp.float32),
        'w2': jax.random.normal(ks[1], (c2, c1), jnp.float32) * 0.1,
        'b2': jnp.zeros((c2, 1), jnp.float32),
        'w3': jax.random.normal(ks[2], (backbone_out_dim, 2 * c2), jnp.float32) * 0.1,
        'b3': jnp.zeros((backbone_out_dim, 1), jnp.float32),
        'wh': jax.random.normal(ks[3], (num_parts * rot_dim, backbone_out_dim), jnp.float32) * 0.1,
        'bh': jnp.zeros((num_parts * rot_dim, 1), jnp.float32),
    }


def _rand_rotations(key, batch_shape):
    v = jax.random.normal(key, batch_shape + (9,), jnp.float32)
    return convert_pred_rtvec_to_matrix(v, sym=False)


if __name__ == "__main__":
    obj_cfg = {'num_parts': 2, 'sym': False, 'tree': [-1, 0]}
    B, N = 2, 128
    P = obj_cfg['num_parts']
    rot_dim = 3 if obj_cfg['sym'] else 9

    key = jax.random.PRNGKey(0)
    ks = jax.random.split(key, 10)

    points = jax.random.normal(ks[0], (B, 3, N), jnp.float32) * 0.1
    points_mean = jax.random.normal(ks[1], (B, 3, 1), jnp.float32) * 0.05
    labels = jax.random.randint(ks[2], (B, N), 0, P + 2)   # includes 2 "background" ids

    part_pose = {
        'rotation': _rand_rotations(ks[3], (B, P)),
        'translation': jax.random.normal(ks[4], (B, P, 3, 1), jnp.float32) * 0.1,
        'scale': jax.random.uniform(ks[5], (B, P), jnp.float32, 0.8, 1.2),
    }
    gt_part = {
        'rotation': _rand_rotations(ks[6], (B, P)),
        'translation': jax.random.normal(ks[7], (B, P, 3, 1), jnp.float32) * 0.1,
        'scale': jax.random.uniform(ks[8], (B, P), jnp.float32, 0.8, 1.2),
    }

    inp = {
        'points': points,
        'points_mean': points_mean,
        'labels': labels,
        'state': {'part': part_pose},
        'gt_part': gt_part,
    }

    params = init_params(ks[9], P, rot_dim)

    out = part_canon_net_forward(inp, params, obj_cfg)
    jax.block_until_ready(out)

    assert out['part']['rotation'].shape == (B, P, 3, 3)
    assert out['part']['translation'].shape == (B, P, 3, 1)
    assert out['part']['scale'].shape == (B, P)
    assert out['point_rotation'].shape == (B, P, N, 3, 3)
    print("KERNEL_OK")
</pallas_src>

<mosaic_0001>
module attributes {stable_mosaic.version = 11 : i64} {
  func.func @kernel(%arg0: i32, %arg1: memref<1x3x128xf32, #tpu.memory_space<vmem>>, %arg2: memref<1x1x128xi32, #tpu.memory_space<vmem>>, %arg3: memref<1x2x64x4xf32, #tpu.memory_space<vmem>>, %arg4: memref<128x64xbf16, #tpu.memory_space<vmem>>, %arg5: memref<128x1xf32, #tpu.memory_space<vmem>>, %arg6: memref<128x128xbf16, #tpu.memory_space<vmem>>, %arg7: memref<128x128xbf16, #tpu.memory_space<vmem>>, %arg8: memref<128x1xf32, #tpu.memory_space<vmem>>, %arg9: memref<2x9x128xbf16, #tpu.memory_space<vmem>>, %arg10: memref<2x9x1xf32, #tpu.memory_space<vmem>>, %arg11: memref<1x2x9x128xf32, #tpu.memory_space<vmem>>, %arg12: memref<1x2x9x1xf32, #tpu.memory_space<vmem>>) attributes {dimension_semantics = [#tpu.dimension_semantics<parallel>], iteration_bounds = array<i64: 2>, scalar_prefetch = 0 : i64, scratch_operands = 0 : i64, tpu.core_type = #tpu.core_type<tc>, window_params = [{transform_indices = @transform_0, window_bounds = array<i64: 1, 3, 128>}, {transform_indices = @transform_1, window_bounds = array<i64: 1, 1, 128>}, {transform_indices = @transform_2, window_bounds = array<i64: 1, 2, 64, 4>}, {pipeline_mode = #tpu.pipeline_mode<synchronous>, transform_indices = @transform_3, window_bounds = array<i64: 128, 64>}, {pipeline_mode = #tpu.pipeline_mode<synchronous>, transform_indices = @transform_4, window_bounds = array<i64: 128, 1>}, {pipeline_mode = #tpu.pipeline_mode<synchronous>, transform_indices = @transform_5, window_bounds = array<i64: 128, 128>}, {pipeline_mode = #tpu.pipeline_mode<synchronous>, transform_indices = @transform_6, window_bounds = array<i64: 128, 128>}, {pipeline_mode = #tpu.pipeline_mode<synchronous>, transform_indices = @transform_7, window_bounds = array<i64: 128, 1>}, {pipeline_mode = #tpu.pipeline_mode<synchronous>, transform_indices = @transform_8, window_bounds = array<i64: 2, 9, 128>}, {pipeline_mode = #tpu.pipeline_mode<synchronous>, transform_indices = @transform_9, window_bounds = array<i64: 2, 9, 1>}, {transform_indices = @transform_10, window_bounds = array<i64: 1, 2, 9, 128>}, {transform_indices = @transform_11, window_bounds = array<i64: 1, 2, 9, 1>}]} {
    %c0 = arith.constant 0 : index
    %c0_0 = arith.constant 0 : index
    %c0_1 = arith.constant 0 : index
    %0 = vector.load %arg1[%c0, %c0_0, %c0_1] : memref<1x3x128xf32, #tpu.memory_space<vmem>>, vector<1x3x128xf32>
    %1 = vector.shape_cast %0 : vector<1x3x128xf32> to vector<3x128xf32>
    %c0_2 = arith.constant 0 : index
    %c0_3 = arith.constant 0 : index
    %c0_4 = arith.constant 0 : index
    %2 = vector.load %arg2[%c0_2, %c0_3, %c0_4] : memref<1x1x128xi32, #tpu.memory_space<vmem>>, vector<1x1x128xi32>
    %3 = vector.shape_cast %2 : vector<1x1x128xi32> to vector<1x128xi32>
    %c0_5 = arith.constant 0 : index
    %c0_6 = arith.constant 0 : index
    %4 = vector.load %arg4[%c0_5, %c0_6] : memref<128x64xbf16, #tpu.memory_space<vmem>>, vector<128x64xbf16>
    %c0_7 = arith.constant 0 : index
    %c0_8 = arith.constant 0 : index
    %5 = vector.load %arg5[%c0_7, %c0_8] : memref<128x1xf32, #tpu.memory_space<vmem>>, vector<128x1xf32>
    %c0_9 = arith.constant 0 : index
    %c0_10 = arith.constant 0 : index
    %6 = vector.load %arg6[%c0_9, %c0_10] : memref<128x128xbf16, #tpu.memory_space<vmem>>, vector<128x128xbf16>
    %c0_11 = arith.constant 0 : index
    %c0_12 = arith.constant 0 : index
    %7 = vector.load %arg7[%c0_11, %c0_12] : memref<128x128xbf16, #tpu.memory_space<vmem>>, vector<128x128xbf16>
    %c0_13 = arith.constant 0 : index
    %c0_14 = arith.constant 0 : index
    %8 = vector.load %arg8[%c0_13, %c0_14] : memref<128x1xf32, #tpu.memory_space<vmem>>, vector<128x1xf32>
    %c0_15 = arith.constant 0 : index
    %c0_16 = arith.constant 0 : index
    %c0_17 = arith.constant 0 : index
    %c0_18 = arith.constant 0 : index
    %9 = vector.load %arg3[%c0_15, %c0_16, %c0_17, %c0_18] : memref<1x2x64x4xf32, #tpu.memory_space<vmem>>, vector<1x1x64x4xf32>
    %10 = vector.shape_cast %9 : vector<1x1x64x4xf32> to vector<64x4xf32>
    %11 = vector.extract_strided_slice %10 {offsets = [0, 0], sizes = [64, 3], strides = [1, 1]} : vector<64x4xf32> to vector<64x3xf32>
    %12 = vector.extract_strided_slice %10 {offsets = [0, 3], sizes = [64, 1], strides = [1, 1]} : vector<64x4xf32> to vector<64x1xf32>
    %cst = arith.constant dense<0.000000e+00> : vector<64x128xf32>
    %13 = tpu.matmul %11, %1, %cst {dimension_numbers = #tpu.dot_dimension_numbers<[1], [0], [0], [1], [0, 0, 1, 1], [], []>} : vector<64x3xf32>, vector<3x128xf32>, vector<64x128xf32> -> vector<64x128xf32>
    %14 = vector.broadcast %12 : vector<64x1xf32> to vector<64x128xf32>
    %15 = arith.addf %13, %14 : vector<64x128xf32>
    %cst_19 = arith.constant 0.000000e+00 : f32
    %16 = vector.broadcast %cst_19 : f32 to vector<64x128xf32>
    %17 = arith.maximumf %15, %16 : vector<64x128xf32>
    %18 = arith.truncf %17 : vector<64x128xf32> to vector<64x128xbf16>
    %cst_20 = arith.constant dense<0.000000e+00> : vector<128x128xf32>
    %19 = tpu.matmul %4, %18, %cst_20 {dimension_numbers = #tpu.dot_dimension_numbers<[1], [0], [0], [1], [0, 0, 1, 1], [], []>} : vector<128x64xbf16>, vector<64x128xbf16>, vector<128x128xf32> -> vector<128x128xf32>
    %20 = vector.broadcast %5 : vector<128x1xf32> to vector<128x128xf32>
    %21 = arith.addf %19, %20 : vector<128x128xf32>
    %cst_21 = arith.constant 0.000000e+00 : f32
    %22 = vector.broadcast %cst_21 : f32 to vector<128x128xf32>
    %23 = arith.maximumf %21, %22 : vector<128x128xf32>
    %cst_22 = arith.constant dense<0xFF800000> : vector<128xf32>
    %24 = vector.multi_reduction <maximumf>, %23, %cst_22 [1] : vector<128x128xf32> to vector<128xf32>
    %25 = vector.shape_cast %24 : vector<128xf32> to vector<128x1xf32>
    %26 = arith.truncf %23 : vector<128x128xf32> to vector<128x128xbf16>
    %cst_23 = arith.constant dense<0.000000e+00> : vector<128x128xf32>
    %27 = tpu.matmul %6, %26, %cst_23 {dimension_numbers = #tpu.dot_dimension_numbers<[1], [0], [0], [1], [0, 0, 1, 1], [], []>} : vector<128x128xbf16>, vector<128x128xbf16>, vector<128x128xf32> -> vector<128x128xf32>
    %28 = arith.truncf %25 : vector<128x1xf32> to vector<128x1xbf16>
    %cst_24 = arith.constant dense<0.000000e+00> : vector<128x1xf32>
    %29 = tpu.matmul %7, %28, %cst_24 {dimension_numbers = #tpu.dot_dimension_numbers<[1], [0], [0], [1], [0, 0, 1, 1], [], []>} : vector<128x128xbf16>, vector<128x1xbf16>, vector<128x1xf32> -> vector<128x1xf32>
    %30 = vector.broadcast %29 : vector<128x1xf32> to vector<128x128xf32>
    %31 = arith.addf %27, %30 : vector<128x128xf32>
    %32 = vector.broadcast %8 : vector<128x1xf32> to vector<128x128xf32>
    %33 = arith.addf %31, %32 : vector<128x128xf32>
    %cst_25 = arith.constant 0.000000e+00 : f32
    %34 = vector.broadcast %cst_25 : f32 to vector<128x128xf32>
    %35 = arith.maximumf %33, %34 : vector<128x128xf32>
    %36 = arith.truncf %35 : vector<128x128xf32> to vector<128x128xbf16>
    %c0_26 = arith.constant 0 : index
    %c0_27 = arith.constant 0 : index
    %c0_28 = arith.constant 0 : index
    %37 = vector.load %arg9[%c0_26, %c0_27, %c0_28] : memref<2x9x128xbf16, #tpu.memory_space<vmem>>, vector<1x9x128xbf16>
    %38 = vector.shape_cast %37 : vector<1x9x128xbf16> to vector<9x128xbf16>
    %cst_29 = arith.constant dense<0.000000e+00> : vector<9x128xf32>
    %39 = tpu.matmul %38, %36, %cst_29 {dimension_numbers = #tpu.dot_dimension_numbers<[1], [0], [0], [1], [0, 0, 1, 1], [], []>} : vector<9x128xbf16>, vector<128x128xbf16>, vector<9x128xf32> -> vector<9x128xf32>
    %c0_30 = arith.constant 0 : index
    %c0_31 = arith.constant 0 : index
    %c0_32 = arith.constant 0 : index
    %40 = vector.load %arg10[%c0_30, %c0_31, %c0_32] : memref<2x9x1xf32, #tpu.memory_space<vmem>>, vector<1x9x1xf32>
    %41 = vector.shape_cast %40 : vector<1x9x1xf32> to vector<9x1xf32>
    %42 = vector.broadcast %41 : vector<9x1xf32> to vector<9x128xf32>
    %43 = arith.addf %39, %42 : vector<9x128xf32>
    %c0_i32 = arith.constant 0 : i32
    %44 = vector.broadcast %c0_i32 : i32 to vector<1x128xi32>
    %45 = arith.cmpi eq, %3, %44 : vector<1x128xi32>
    %46 = arith.extui %45 : vector<1x128xi1> to vector<1x128xi32>
    %47 = arith.sitofp %46 : vector<1x128xi32> to vector<1x128xf32>
    %48 = vector.broadcast %47 : vector<1x128xf32> to vector<9x128xf32>
    %49 = arith.mulf %43, %48 : vector<9x128xf32>
    %cst_33 = arith.constant dense<0.000000e+00> : vector<9xf32>
    %50 = vector.multi_reduction <add>, %49, %cst_33 [1] : vector<9x128xf32> to vector<9xf32>
    %51 = vector.shape_cast %50 : vector<9xf32> to vector<9x1xf32>
    %c0_34 = arith.constant 0 : index
    %c0_35 = arith.constant 0 : index
    %c0_36 = arith.constant 0 : index
    %c0_37 = arith.constant 0 : index
    %52 = vector.load %arg12[%c0_34, %c0_35, %c0_36, %c0_37] : memref<1x2x9x1xf32, #tpu.memory_space<vmem>>, vector<1x1x9x1xf32>
    %53 = vector.shape_cast %52 : vector<1x1x9x1xf32> to vector<9x1xf32>
    %54 = vector.shape_cast %51 : vector<9x1xf32> to vector<1x1x9x1xf32>
    tpu.vector_store %arg12[%c0_34, %c0_35, %c0_36, %c0_37], %54 {strides = array<i32>} : memref<1x2x9x1xf32, #tpu.memory_space<vmem>>, vector<1x1x9x1xf32>,
    %55 = vector.extract_strided_slice %43 {offsets = [0, 0], sizes = [3, 128], strides = [1, 1]} : vector<9x128xf32> to vector<3x128xf32>
    %56 = vector.extract_strided_slice %43 {offsets = [3, 0], sizes = [3, 128], strides = [1, 1]} : vector<9x128xf32> to vector<3x128xf32>
    %57 = arith.mulf %55, %55 : vector<3x128xf32>
    %cst_38 = arith.constant dense<0.000000e+00> : vector<128xf32>
    %58 = vector.multi_reduction <add>, %57, %cst_38 [0] : vector<3x128xf32> to vector<128xf32>
    %59 = vector.shape_cast %58 : vector<128xf32> to vector<1x128xf32>
    %cst_39 = arith.constant 9.99999996E-13 : f32
    %60 = vector.broadcast %cst_39 : f32 to vector<1x128xf32>
    %61 = arith.maximumf %59, %60 : vector<1x128xf32>
    %62 = math.rsqrt %61 : vector<1x128xf32>
    %63 = vector.broadcast %62 : vector<1x128xf32> to vector<3x128xf32>
    %64 = arith.mulf %55, %63 : vector<3x128xf32>
    %65 = arith.mulf %64, %56 : vector<3x128xf32>
    %cst_40 = arith.constant dense<0.000000e+00> : vector<128xf32>
    %66 = vector.multi_reduction <add>, %65, %cst_40 [0] : vector<3x128xf32> to vector<128xf32>
    %67 = vector.shape_cast %66 : vector<128xf32> to vector<1x128xf32>
    %68 = vector.broadcast %67 : vector<1x128xf32> to vector<3x128xf32>
    %69 = arith.mulf %68, %64 : vector<3x128xf32>
    %70 = arith.subf %56, %69 : vector<3x128xf32>
    %71 = arith.mulf %70, %70 : vector<3x128xf32>
    %cst_41 = arith.constant dense<0.000000e+00> : vector<128xf32>
    %72 = vector.multi_reduction <add>, %71, %cst_41 [0] : vector<3x128xf32> to vector<128xf32>
    %73 = vector.shape_cast %72 : vector<128xf32> to vector<1x128xf32>
    %cst_42 = arith.constant 9.99999996E-13 : f32
    %74 = vector.broadcast %cst_42 : f32 to vector<1x128xf32>
    %75 = arith.maximumf %73, %74 : vector<1x128xf32>
    %76 = math.rsqrt %75 : vector<1x128xf32>
    %77 = vector.broadcast %76 : vector<1x128xf32> to vector<3x128xf32>
    %78 = arith.mulf %70, %77 : vector<3x128xf32>
    %79 = vector.extract_strided_slice %64 {offsets = [0, 0], sizes = [1, 128], strides = [1, 1]} : vector<3x128xf32> to vector<1x128xf32>
    %80 = vector.extract_strided_slice %64 {offsets = [1, 0], sizes = [1, 128], strides = [1, 1]} : vector<3x128xf32> to vector<1x128xf32>
    %81 = vector.extract_strided_slice %64 {offsets = [2, 0], sizes = [1, 128], strides = [1, 1]} : vector<3x128xf32> to vector<1x128xf32>
    %82 = vector.extract_strided_slice %78 {offsets = [0, 0], sizes = [1, 128], strides = [1, 1]} : vector<3x128xf32> to vector<1x128xf32>
    %83 = vector.extract_strided_slice %78 {offsets = [1, 0], sizes = [1, 128], strides = [1, 1]} : vector<3x128xf32> to vector<1x128xf32>
    %84 = vector.extract_strided_slice %78 {offsets = [2, 0], sizes = [1, 128], strides = [1, 1]} : vector<3x128xf32> to vector<1x128xf32>
    %c0_43 = arith.constant 0 : index
    %c0_44 = arith.constant 0 : index
    %c0_45 = arith.constant 0 : index
    %c0_46 = arith.constant 0 : index
    %85 = vector.load %arg11[%c0_43, %c0_44, %c0_45, %c0_46] : memref<1x2x9x128xf32, #tpu.memory_space<vmem>>, vector<1x1x3x128xf32>
    %86 = vector.shape_cast %85 : vector<1x1x3x128xf32> to vector<3x128xf32>
    %87 = vector.shape_cast %64 : vector<3x128xf32> to vector<1x1x3x128xf32>
    tpu.vector_store %arg11[%c0_43, %c0_44, %c0_45, %c0_46], %87 {strides = array<i32>} : memref<1x2x9x128xf32, #tpu.memory_space<vmem>>, vector<1x1x3x128xf32>,
    %c0_47 = arith.constant 0 : index
    %c0_48 = arith.constant 0 : index
    %c3 = arith.constant 3 : index
    %c0_49 = arith.constant 0 : index
    %88 = vector.load %arg11[%c0_47, %c0_48, %c3, %c0_49] : memref<1x2x9x128xf32, #tpu.memory_space<vmem>>, vector<1x1x3x128xf32>
    %89 = vector.shape_cast %88 : vector<1x1x3x128xf32> to vector<3x128xf32>
    %90 = vector.shape_cast %78 : vector<3x128xf32> to vector<1x1x3x128xf32>
    tpu.vector_store %arg11[%c0_47, %c0_48, %c3, %c0_49], %90 {strides = array<i32>} : memref<1x2x9x128xf32, #tpu.memory_space<vmem>>, vector<1x1x3x128xf32>,
    %91 = arith.mulf %80, %84 : vector<1x128xf32>
    %92 = arith.mulf %81, %83 : vector<1x128xf32>
    %93 = arith.subf %91, %92 : vector<1x128xf32>
    %c0_50 = arith.constant 0 : index
    %c0_51 = arith.constant 0 : index
    %c6 = arith.constant 6 : index
    %c0_52 = arith.constant 0 : index
    %94 = vector.load %arg11[%c0_50, %c0_51, %c6, %c0_52] : memref<1x2x9x128xf32, #tpu.memory_space<vmem>>, vector<1x1x1x128xf32>
    %95 = vector.shape_cast %94 : vector<1x1x1x128xf32> to vector<1x128xf32>
    %96 = vector.shape_cast %93 : vector<1x128xf32> to vector<1x1x1x128xf32>
    tpu.vector_store %arg11[%c0_50, %c0_51, %c6, %c0_52], %96 {strides = array<i32>} : memref<1x2x9x128xf32, #tpu.memory_space<vmem>>, vector<1x1x1x128xf32>,
    %97 = arith.mulf %81, %82 : vector<1x128xf32>
    %98 = arith.mulf %79, %84 : vector<1x128xf32>
    %99 = arith.subf %97, %98 : vector<1x128xf32>
    %c0_53 = arith.constant 0 : index
    %c0_54 = arith.constant 0 : index
    %c7 = arith.constant 7 : index
    %c0_55 = arith.constant 0 : index
    %100 = vector.load %arg11[%c0_53, %c0_54, %c7, %c0_55] : memref<1x2x9x128xf32, #tpu.memory_space<vmem>>, vector<1x1x1x128xf32>
    %101 = vector.shape_cast %100 : vector<1x1x1x128xf32> to vector<1x128xf32>
    %102 = vector.shape_cast %99 : vector<1x128xf32> to vector<1x1x1x128xf32>
    tpu.vector_store %arg11[%c0_53, %c0_54, %c7, %c0_55], %102 {strides = array<i32>} : memref<1x2x9x128xf32, #tpu.memory_space<vmem>>, vector<1x1x1x128xf32>,
    %103 = arith.mulf %79, %83 : vector<1x128xf32>
    %104 = arith.mulf %80, %82 : vector<1x128xf32>
    %105 = arith.subf %103, %104 : vector<1x128xf32>
    %c0_56 = arith.constant 0 : index
    %c0_57 = arith.constant 0 : index
    %c8 = arith.constant 8 : index
    %c0_58 = arith.constant 0 : index
    %106 = vector.load %arg11[%c0_56, %c0_57, %c8, %c0_58] : memref<1x2x9x128xf32, #tpu.memory_space<vmem>>, vector<1x1x1x128xf32>
    %107 = vector.shape_cast %106 : vector<1x1x1x128xf32> to vector<1x128xf32>
    %108 = vector.shape_cast %105 : vector<1x128xf32> to vector<1x1x1x128xf32>
    tpu.vector_store %arg11[%c0_56, %c0_57, %c8, %c0_58], %108 {strides = array<i32>} : memref<1x2x9x128xf32, #tpu.memory_space<vmem>>, vector<1x1x1x128xf32>,
    %c0_59 = arith.constant 0 : index
    %c1 = arith.constant 1 : index
    %c0_60 = arith.constant 0 : index
    %c0_61 = arith.constant 0 : index
    %109 = vector.load %arg3[%c0_59, %c1, %c0_60, %c0_61] : memref<1x2x64x4xf32, #tpu.memory_space<vmem>>, vector<1x1x64x4xf32>
    %110 = vector.shape_cast %109 : vector<1x1x64x4xf32> to vector<64x4xf32>
    %111 = vector.extract_strided_slice %110 {offsets = [0, 0], sizes = [64, 3], strides = [1, 1]} : vector<64x4xf32> to vector<64x3xf32>
    %112 = vector.extract_strided_slice %110 {offsets = [0, 3], sizes = [64, 1], strides = [1, 1]} : vector<64x4xf32> to vector<64x1xf32>
    %cst_62 = arith.constant dense<0.000000e+00> : vector<64x128xf32>
    %113 = tpu.matmul %111, %1, %cst_62 {dimension_numbers = #tpu.dot_dimension_numbers<[1], [0], [0], [1], [0, 0, 1, 1], [], []>} : vector<64x3xf32>, vector<3x128xf32>, vector<64x128xf32> -> vector<64x128xf32>
    %114 = vector.broadcast %112 : vector<64x1xf32> to vector<64x128xf32>
    %115 = arith.addf %113, %114 : vector<64x128xf32>
    %cst_63 = arith.constant 0.000000e+00 : f32
    %116 = vector.broadcast %cst_63 : f32 to vector<64x128xf32>
    %117 = arith.maximumf %115, %116 : vector<64x128xf32>
    %118 = arith.truncf %117 : vector<64x128xf32> to vector<64x128xbf16>
    %cst_64 = arith.constant dense<0.000000e+00> : vector<128x128xf32>
    %119 = tpu.matmul %4, %118, %cst_64 {dimension_numbers = #tpu.dot_dimension_numbers<[1], [0], [0], [1], [0, 0, 1, 1], [], []>} : vector<128x64xbf16>, vector<64x128xbf16>, vector<128x128xf32> -> vector<128x128xf32>
    %120 = vector.broadcast %5 : vector<128x1xf32> to vector<128x128xf32>
    %121 = arith.addf %119, %120 : vector<128x128xf32>
    %cst_65 = arith.constant 0.000000e+00 : f32
    %122 = vector.broadcast %cst_65 : f32 to vector<128x128xf32>
    %123 = arith.maximumf %121, %122 : vector<128x128xf32>
    %cst_66 = arith.constant dense<0xFF800000> : vector<128xf32>
    %124 = vector.multi_reduction <maximumf>, %123, %cst_66 [1] : vector<128x128xf32> to vector<128xf32>
    %125 = vector.shape_cast %124 : vector<128xf32> to vector<128x1xf32>
    %126 = arith.truncf %123 : vector<128x128xf32> to vector<128x128xbf16>
    %cst_67 = arith.constant dense<0.000000e+00> : vector<128x128xf32>
    %127 = tpu.matmul %6, %126, %cst_67 {dimension_numbers = #tpu.dot_dimension_numbers<[1], [0], [0], [1], [0, 0, 1, 1], [], []>} : vector<128x128xbf16>, vector<128x128xbf16>, vector<128x128xf32> -> vector<128x128xf32>
    %128 = arith.truncf %125 : vector<128x1xf32> to vector<128x1xbf16>
    %cst_68 = arith.constant dense<0.000000e+00> : vector<128x1xf32>
    %129 = tpu.matmul %7, %128, %cst_68 {dimension_numbers = #tpu.dot_dimension_numbers<[1], [0], [0], [1], [0, 0, 1, 1], [], []>} : vector<128x128xbf16>, vector<128x1xbf16>, vector<128x1xf32> -> vector<128x1xf32>
    %130 = vector.broadcast %129 : vector<128x1xf32> to vector<128x128xf32>
    %131 = arith.addf %127, %130 : vector<128x128xf32>
    %132 = vector.broadcast %8 : vector<128x1xf32> to vector<128x128xf32>
    %133 = arith.addf %131, %132 : vector<128x128xf32>
    %cst_69 = arith.constant 0.000000e+00 : f32
    %134 = vector.broadcast %cst_69 : f32 to vector<128x128xf32>
    %135 = arith.maximumf %133, %134 : vector<128x128xf32>
    %136 = arith.truncf %135 : vector<128x128xf32> to vector<128x128xbf16>
    %c1_70 = arith.constant 1 : index
    %c0_71 = arith.constant 0 : index
    %c0_72 = arith.constant 0 : index
    %137 = vector.load %arg9[%c1_70, %c0_71, %c0_72] : memref<2x9x128xbf16, #tpu.memory_space<vmem>>, vector<1x9x128xbf16>
    %138 = vector.shape_cast %137 : vector<1x9x128xbf16> to vector<9x128xbf16>
    %cst_73 = arith.constant dense<0.000000e+00> : vector<9x128xf32>
    %139 = tpu.matmul %138, %136, %cst_73 {dimension_numbers = #tpu.dot_dimension_numbers<[1], [0], [0], [1], [0, 0, 1, 1], [], []>} : vector<9x128xbf16>, vector<128x128xbf16>, vector<9x128xf32> -> vector<9x128xf32>
    %c1_74 = arith.constant 1 : index
    %c0_75 = arith.constant 0 : index
    %c0_76 = arith.constant 0 : index
    %140 = vector.load %arg10[%c1_74, %c0_75, %c0_76] : memref<2x9x1xf32, #tpu.memory_space<vmem>>, vector<1x9x1xf32>
    %141 = vector.shape_cast %140 : vector<1x9x1xf32> to vector<9x1xf32>
    %142 = vector.broadcast %141 : vector<9x1xf32> to vector<9x128xf32>
    %143 = arith.addf %139, %142 : vector<9x128xf32>
    %c1_i32 = arith.constant 1 : i32
    %144 = vector.broadcast %c1_i32 : i32 to vector<1x128xi32>
    %145 = arith.cmpi eq, %3, %144 : vector<1x128xi32>
    %146 = arith.extui %145 : vector<1x128xi1> to vector<1x128xi32>
    %147 = arith.sitofp %146 : vector<1x128xi32> to vector<1x128xf32>
    %148 = vector.broadcast %147 : vector<1x128xf32> to vector<9x128xf32>
    %149 = arith.mulf %143, %148 : vector<9x128xf32>
    %cst_77 = arith.constant dense<0.000000e+00> : vector<9xf32>
    %150 = vector.multi_reduction <add>, %149, %cst_77 [1] : vector<9x128xf32> to vector<9xf32>
    %151 = vector.shape_cast %150 : vector<9xf32> to vector<9x1xf32>
    %c0_78 = arith.constant 0 : index
    %c1_79 = arith.constant 1 : index
    %c0_80 = arith.constant 0 : index
    %c0_81 = arith.constant 0 : index
    %152 = vector.load %arg12[%c0_78, %c1_79, %c0_80, %c0_81] : memref<1x2x9x1xf32, #tpu.memory_space<vmem>>, vector<1x1x9x1xf32>
    %153 = vector.shape_cast %152 : vector<1x1x9x1xf32> to vector<9x1xf32>
    %154 = vector.shape_cast %151 : vector<9x1xf32> to vector<1x1x9x1xf32>
    tpu.vector_store %arg12[%c0_78, %c1_79, %c0_80, %c0_81], %154 {strides = array<i32>} : memref<1x2x9x1xf32, #tpu.memory_space<vmem>>, vector<1x1x9x1xf32>,
    %155 = vector.extract_strided_slice %143 {offsets = [0, 0], sizes = [3, 128], strides = [1, 1]} : vector<9x128xf32> to vector<3x128xf32>
    %156 = vector.extract_strided_slice %143 {offsets = [3, 0], sizes = [3, 128], strides = [1, 1]} : vector<9x128xf32> to vector<3x128xf32>
    %157 = arith.mulf %155, %155 : vector<3x128xf32>
    %cst_82 = arith.constant dense<0.000000e+00> : vector<128xf32>
    %158 = vector.multi_reduction <add>, %157, %cst_82 [0] : vector<3x128xf32> to vector<128xf32>
    %159 = vector.shape_cast %158 : vector<128xf32> to vector<1x128xf32>
    %cst_83 = arith.constant 9.99999996E-13 : f32
    %160 = vector.broadcast %cst_83 : f32 to vector<1x128xf32>
    %161 = arith.maximumf %159, %160 : vector<1x128xf32>
    %162 = math.rsqrt %161 : vector<1x128xf32>
    %163 = vector.broadcast %162 : vector<1x128xf32> to vector<3x128xf32>
    %164 = arith.mulf %155, %163 : vector<3x128xf32>
    %165 = arith.mulf %164, %156 : vector<3x128xf32>
    %cst_84 = arith.constant dense<0.000000e+00> : vector<128xf32>
    %166 = vector.multi_reduction <add>, %165, %cst_84 [0] : vector<3x128xf32> to vector<128xf32>
    %167 = vector.shape_cast %166 : vector<128xf32> to vector<1x128xf32>
    %168 = vector.broadcast %167 : vector<1x128xf32> to vector<3x128xf32>
    %169 = arith.mulf %168, %164 : vector<3x128xf32>
    %170 = arith.subf %156, %169 : vector<3x128xf32>
    %171 = arith.mulf %170, %170 : vector<3x128xf32>
    %cst_85 = arith.constant dense<0.000000e+00> : vector<128xf32>
    %172 = vector.multi_reduction <add>, %171, %cst_85 [0] : vector<3x128xf32> to vector<128xf32>
    %173 = vector.shape_cast %172 : vector<128xf32> to vector<1x128xf32>
    %cst_86 = arith.constant 9.99999996E-13 : f32
    %174 = vector.broadcast %cst_86 : f32 to vector<1x128xf32>
    %175 = arith.maximumf %173, %174 : vector<1x128xf32>
    %176 = math.rsqrt %175 : vector<1x128xf32>
    %177 = vector.broadcast %176 : vector<1x128xf32> to vector<3x128xf32>
    %178 = arith.mulf %170, %177 : vector<3x128xf32>
    %179 = vector.extract_strided_slice %164 {offsets = [0, 0], sizes = [1, 128], strides = [1, 1]} : vector<3x128xf32> to vector<1x128xf32>
    %180 = vector.extract_strided_slice %164 {offsets = [1, 0], sizes = [1, 128], strides = [1, 1]} : vector<3x128xf32> to vector<1x128xf32>
    %181 = vector.extract_strided_slice %164 {offsets = [2, 0], sizes = [1, 128], strides = [1, 1]} : vector<3x128xf32> to vector<1x128xf32>
    %182 = vector.extract_strided_slice %178 {offsets = [0, 0], sizes = [1, 128], strides = [1, 1]} : vector<3x128xf32> to vector<1x128xf32>
    %183 = vector.extract_strided_slice %178 {offsets = [1, 0], sizes = [1, 128], strides = [1, 1]} : vector<3x128xf32> to vector<1x128xf32>
    %184 = vector.extract_strided_slice %178 {offsets = [2, 0], sizes = [1, 128], strides = [1, 1]} : vector<3x128xf32> to vector<1x128xf32>
    %c0_87 = arith.constant 0 : index
    %c1_88 = arith.constant 1 : index
    %c0_89 = arith.constant 0 : index
    %c0_90 = arith.constant 0 : index
    %185 = vector.load %arg11[%c0_87, %c1_88, %c0_89, %c0_90] : memref<1x2x9x128xf32, #tpu.memory_space<vmem>>, vector<1x1x3x128xf32>
    %186 = vector.shape_cast %185 : vector<1x1x3x128xf32> to vector<3x128xf32>
    %187 = vector.shape_cast %164 : vector<3x128xf32> to vector<1x1x3x128xf32>
    tpu.vector_store %arg11[%c0_87, %c1_88, %c0_89, %c0_90], %187 {strides = array<i32>} : memref<1x2x9x128xf32, #tpu.memory_space<vmem>>, vector<1x1x3x128xf32>,
    %c0_91 = arith.constant 0 : index
    %c1_92 = arith.constant 1 : index
    %c3_93 = arith.constant 3 : index
    %c0_94 = arith.constant 0 : index
    %188 = vector.load %arg11[%c0_91, %c1_92, %c3_93, %c0_94] : memref<1x2x9x128xf32, #tpu.memory_space<vmem>>, vector<1x1x3x128xf32>
    %189 = vector.shape_cast %188 : vector<1x1x3x128xf32> to vector<3x128xf32>
    %190 = vector.shape_cast %178 : vector<3x128xf32> to vector<1x1x3x128xf32>
    tpu.vector_store %arg11[%c0_91, %c1_92, %c3_93, %c0_94], %190 {strides = array<i32>} : memref<1x2x9x128xf32, #tpu.memory_space<vmem>>, vector<1x1x3x128xf32>,
    %191 = arith.mulf %180, %184 : vector<1x128xf32>
    %192 = arith.mulf %181, %183 : vector<1x128xf32>
    %193 = arith.subf %191, %192 : vector<1x128xf32>
    %c0_95 = arith.constant 0 : index
    %c1_96 = arith.constant 1 : index
    %c6_97 = arith.constant 6 : index
    %c0_98 = arith.constant 0 : index
    %194 = vector.load %arg11[%c0_95, %c1_96, %c6_97, %c0_98] : memref<1x2x9x128xf32, #tpu.memory_space<vmem>>, vector<1x1x1x128xf32>
    %195 = vector.shape_cast %194 : vector<1x1x1x128xf32> to vector<1x128xf32>
    %196 = vector.shape_cast %193 : vector<1x128xf32> to vector<1x1x1x128xf32>
    tpu.vector_store %arg11[%c0_95, %c1_96, %c6_97, %c0_98], %196 {strides = array<i32>} : memref<1x2x9x128xf32, #tpu.memory_space<vmem>>, vector<1x1x1x128xf32>,
    %197 = arith.mulf %181, %182 : vector<1x128xf32>
    %198 = arith.mulf %179, %184 : vector<1x128xf32>
    %199 = arith.subf %197, %198 : vector<1x128xf32>
    %c0_99 = arith.constant 0 : index
    %c1_100 = arith.constant 1 : index
    %c7_101 = arith.constant 7 : index
    %c0_102 = arith.constant 0 : index
    %200 = vector.load %arg11[%c0_99, %c1_100, %c7_101, %c0_102] : memref<1x2x9x128xf32, #tpu.memory_space<vmem>>, vector<1x1x1x128xf32>
    %201 = vector.shape_cast %200 : vector<1x1x1x128xf32> to vector<1x128xf32>
    %202 = vector.shape_cast %199 : vector<1x128xf32> to vector<1x1x1x128xf32>
    tpu.vector_store %arg11[%c0_99, %c1_100, %c7_101, %c0_102], %202 {strides = array<i32>} : memref<1x2x9x128xf32, #tpu.memory_space<vmem>>, vector<1x1x1x128xf32>,
    %203 = arith.mulf %179, %183 : vector<1x128xf32>
    %204 = arith.mulf %180, %182 : vector<1x128xf32>
    %205 = arith.subf %203, %204 : vector<1x128xf32>
    %c0_103 = arith.constant 0 : index
    %c1_104 = arith.constant 1 : index
    %c8_105 = arith.constant 8 : index
    %c0_106 = arith.constant 0 : index
    %206 = vector.load %arg11[%c0_103, %c1_104, %c8_105, %c0_106] : memref<1x2x9x128xf32, #tpu.memory_space<vmem>>, vector<1x1x1x128xf32>
    %207 = vector.shape_cast %206 : vector<1x1x1x128xf32> to vector<1x128xf32>
    %208 = vector.shape_cast %205 : vector<1x128xf32> to vector<1x1x1x128xf32>
    tpu.vector_store %arg11[%c0_103, %c1_104, %c8_105, %c0_106], %208 {strides = array<i32>} : memref<1x2x9x128xf32, #tpu.memory_space<vmem>>, vector<1x1x1x128xf32>,
    return
  }
  func.func @transform_0(%arg0: i32) -> (i32, i32, i32) {
    %c0_i32 = arith.constant 0 : i32
    %c0_i32_0 = arith.constant 0 : i32
    %c0_i32_1 = arith.constant 0 : i32
    return %arg0, %c0_i32, %c0_i32_0 : i32, i32, i32
  }
  func.func @transform_1(%arg0: i32) -> (i32, i32, i32) {
    %c0_i32 = arith.constant 0 : i32
    %c0_i32_0 = arith.constant 0 : i32
    %c0_i32_1 = arith.constant 0 : i32
    return %arg0, %c0_i32, %c0_i32_0 : i32, i32, i32
  }
  func.func @transform_2(%arg0: i32) -> (i32, i32, i32, i32) {
    %c0_i32 = arith.constant 0 : i32
    %c0_i32_0 = arith.constant 0 : i32
    %c0_i32_1 = arith.constant 0 : i32
    %c0_i32_2 = arith.constant 0 : i32
    return %arg0, %c0_i32, %c0_i32_0, %c0_i32_1 : i32, i32, i32, i32
  }
  func.func @transform_3(%arg0: i32) -> (i32, i32) {
    %c0_i32 = arith.constant 0 : i32
    %c0_i32_0 = arith.constant 0 : i32
    %c0_i32_1 = arith.constant 0 : i32
    return %c0_i32, %c0_i32_0 : i32, i32
  }
  func.func @transform_4(%arg0: i32) -> (i32, i32) {
    %c0_i32 = arith.constant 0 : i32
    %c0_i32_0 = arith.constant 0 : i32
    %c0_i32_1 = arith.constant 0 : i32
    return %c0_i32, %c0_i32_0 : i32, i32
  }
  func.func @transform_5(%arg0: i32) -> (i32, i32) {
    %c0_i32 = arith.constant 0 : i32
    %c0_i32_0 = arith.constant 0 : i32
    %c0_i32_1 = arith.constant 0 : i32
    return %c0_i32, %c0_i32_0 : i32, i32
  }
  func.func @transform_6(%arg0: i32) -> (i32, i32) {
    %c0_i32 = arith.constant 0 : i32
    %c0_i32_0 = arith.constant 0 : i32
    %c0_i32_1 = arith.constant 0 : i32
    return %c0_i32, %c0_i32_0 : i32, i32
  }
  func.func @transform_7(%arg0: i32) -> (i32, i32) {
    %c0_i32 = arith.constant 0 : i32
    %c0_i32_0 = arith.constant 0 : i32
    %c0_i32_1 = arith.constant 0 : i32
    return %c0_i32, %c0_i32_0 : i32, i32
  }
  func.func @transform_8(%arg0: i32) -> (i32, i32, i32) {
    %c0_i32 = arith.constant 0 : i32
    %c0_i32_0 = arith.constant 0 : i32
    %c0_i32_1 = arith.constant 0 : i32
    %c0_i32_2 = arith.constant 0 : i32
    return %c0_i32, %c0_i32_0, %c0_i32_1 : i32, i32, i32
  }
  func.func @transform_9(%arg0: i32) -> (i32, i32, i32) {
    %c0_i32 = arith.constant 0 : i32
    %c0_i32_0 = arith.constant 0 : i32
    %c0_i32_1 = arith.constant 0 : i32
    %c0_i32_2 = arith.constant 0 : i32
    return %c0_i32, %c0_i32_0, %c0_i32_1 : i32, i32, i32
  }
  func.func @transform_10(%arg0: i32) -> (i32, i32, i32, i32) {
    %c0_i32 = arith.constant 0 : i32
    %c0_i32_0 = arith.constant 0 : i32
    %c0_i32_1 = arith.constant 0 : i32
    %c0_i32_2 = arith.constant 0 : i32
    return %arg0, %c0_i32, %c0_i32_0, %c0_i32_1 : i32, i32, i32, i32
  }
  func.func @transform_11(%arg0: i32) -> (i32, i32, i32, i32) {
    %c0_i32 = arith.constant 0 : i32
    %c0_i32_0 = arith.constant 0 : i32
    %c0_i32_1 = arith.constant 0 : i32
    %c0_i32_2 = arith.constant 0 : i32
    return %arg0, %c0_i32, %c0_i32_0, %c0_i32_1 : i32, i32, i32, i32
  }
}

</mosaic_0001>

<llo_original>
// kernel: tpu_custom_call.1
$region0: #{tpu_custom_call.1}
  #allocation0 [shape = 'u32[]', space=smem, size = 0x4, offset = 0x4, fixed_abs, tag = 'smem constant byte address 0x4 - core index']
  #allocation1 [shape = 'u32[72,128]{1,0:T(1,128)}', space=vmem, size = 0x9000, scoped, tag = 'internal scratch']
  %s0 = inlined_call_operand.vmem [shape: f32[2,3,128], index: 0, kind: input, shape index: {}]
  %s1 = inlined_call_operand.vmem [shape: s32[2,1,128], index: 1, kind: input, shape index: {}]
  %s2 = inlined_call_operand.vmem [shape: f32[2,2,64,4], index: 2, kind: input, shape index: {}]
  %s3 = inlined_call_operand.vmem [shape: bf16[128,64], index: 3, kind: input, shape index: {}]
  %s4 = inlined_call_operand.vmem [shape: f32[128,1], index: 4, kind: input, shape index: {}]
  %s5 = inlined_call_operand.vmem [shape: bf16[128,128], index: 5, kind: input, shape index: {}]
  %s6 = inlined_call_operand.vmem [shape: bf16[128,128], index: 6, kind: input, shape index: {}]
  %s7 = inlined_call_operand.vmem [shape: f32[128,1], index: 7, kind: input, shape index: {}]
  %s8 = inlined_call_operand.vmem [shape: bf16[2,9,128], index: 8, kind: input, shape index: {}]
  %s9 = inlined_call_operand.vmem [shape: f32[2,9,1], index: 9, kind: input, shape index: {}]
  %s10 = inlined_call_operand.vmem [shape: f32[2,2,9,128], index: 10, kind: output, shape index: {0}]
  %s11 = inlined_call_operand.vmem [shape: f32[2,2,9,1], index: 11, kind: output, shape index: {1}]
  %12 = xla_tuple %s10, %s11
  %s13 = sld [smem:[#allocation0]]
  $region81: #{tpu_custom_call.1} parent=0
    _
  %s15 = ssub.s32 1, %s13
  %s16 = scalar_select 0, %s15, %s13
  loop: start=0, step=1, limit=4
  $region2: #{tpu_custom_call.1} parent=0 // loop_pre_header
    _
  $region3: #{tpu_custom_call.1} parent=0 // loop_header
    %s18 = sphi 0, %s22
    %p19 = scmp.ge.s32.totalorder %s18, 4
    %s28 = sphi 0, %s30
    %s31 = sphi 0, %s28
    %s32 = sphi 0, %s31
    %s48 = sphi 0, %s32
    %s54 = sphi 0, %s56
    %s57 = sphi 0, %s54
    %s58 = sphi 0, %s57
    %s74 = sphi 0, %s58
    %s80 = sphi 0, %s82
    %s83 = sphi 0, %s80
    %s84 = sphi 0, %s83
    %s100 = sphi 0, %s84
    %s104 = sphi 0, %s104
    %s106 = sphi 0, %s104
    %s107 = sphi 0, %s106
    %s121 = sphi 0, %s107
    %s125 = sphi 0, %s125
    %s127 = sphi 0, %s125
    %s128 = sphi 0, %s127
    %s142 = sphi 0, %s128
    %s146 = sphi 0, %s146
    %s148 = sphi 0, %s146
    %s149 = sphi 0, %s148
    %s163 = sphi 0, %s149
    %s167 = sphi 0, %s167
    %s169 = sphi 0, %s167
    %s170 = sphi 0, %s169
    %s184 = sphi 0, %s170
    %s188 = sphi 0, %s188
    %s190 = sphi 0, %s188
    %s191 = sphi 0, %s190
    %s205 = sphi 0, %s191
    %s209 = sphi 0, %s209
    %s211 = sphi 0, %s209
    %s212 = sphi 0, %s211
    %s226 = sphi 0, %s212
    %s230 = sphi 0, %s230
    %s232 = sphi 0, %s230
    %s233 = sphi 0, %s232
    %s247 = sphi 0, %s233
    %s253 = sphi 0, %s255
    %s256 = sphi 0, %s253
    %s257 = sphi 0, %s256
    %s273 = sphi 0, %s257
    %s279 = sphi 0, %s281
    %s282 = sphi 0, %s279
    %s283 = sphi 0, %s282
    %s299 = sphi 0, %s283
  $region4: #{tpu_custom_call.1} parent=0 // loop_header_branch
    %21 = sbr.rel (%p19) target = $region8
  $region5: #{tpu_custom_call.1} parent=0 // loop_body
    %s23 = ssub.s32 %s18, 1
    %s24 = ssub.s32 %s18, 2
    %s25 = sadd.s32 %s18, 1
    %s26 = ssub.s32 %s18, %s25
    %p27 = scmp.eq.s32.totalorder %s26, 0
    %s29 = sadd.s32 %s28, 1
    %s30 = scalar_select %p27, %s28, %s29
    %p33 = pneg %p27
    %p34 = scmp.eq.s32.totalorder %s18, 1
    %p35 = por %p33, %p34
    %p36 = scmp.ne.s32.totalorder %s28, %s31
    %p37 = scmp.eq.s32.totalorder %s18, 0
    %p38 = por %p36, %p37
    %p39 = scmp.ne.s32.totalorder %s28, %s31
    %p40 = scmp.eq.s32.totalorder %s23, 1
    %p41 = por %p39, %p40
    %p42 = scmp.ne.s32.totalorder %s31, %s32
    %p43 = scmp.eq.s32.totalorder %s23, 0
    %p44 = por %p42, %p43
    %p45 = scmp.ne.s32.totalorder %s31, %s32
    %p46 = scmp.eq.s32.totalorder %s24, 1
    %p47 = por %p45, %p46
    %p49 = scmp.ne.s32.totalorder %s32, %s48
    %p50 = scmp.eq.s32.totalorder %s24, 0
    %p51 = por %p49, %p50
    %s52 = ssub.s32 %s18, %s25
    %p53 = scmp.eq.s32.totalorder %s52, 0
    %s55 = sadd.s32 %s54, 1
    %s56 = scalar_select %p53, %s54, %s55
    %p59 = pneg %p53
    %p60 = scmp.eq.s32.totalorder %s18, 1
    %p61 = por %p59, %p60
    %p62 = scmp.ne.s32.totalorder %s54, %s57
    %p63 = scmp.eq.s32.totalorder %s18, 0
    %p64 = por %p62, %p63
    %p65 = scmp.ne.s32.totalorder %s54, %s57
    %p66 = scmp.eq.s32.totalorder %s23, 1
    %p67 = por %p65, %p66
    %p68 = scmp.ne.s32.totalorder %s57, %s58
    %p69 = scmp.eq.s32.totalorder %s23, 0
    %p70 = por %p68, %p69
    %p71 = scmp.ne.s32.totalorder %s57, %s58
    %p72 = scmp.eq.s32.totalorder %s24, 1
    %p73 = por %p71, %p72
    %p75 = scmp.ne.s32.totalorder %s58, %s74
    %p76 = scmp.eq.s32.totalorder %s24, 0
    %p77 = por %p75, %p76
    %s78 = ssub.s32 %s18, %s25
    %p79 = scmp.eq.s32.totalorder %s78, 0
    %s81 = sadd.s32 %s80, 1
    %s82 = scalar_select %p79, %s80, %s81
    %p85 = pneg %p79
    %p86 = scmp.eq.s32.totalorder %s18, 1
    %p87 = por %p85, %p86
    %p88 = scmp.ne.s32.totalorder %s80, %s83
    %p89 = scmp.eq.s32.totalorder %s18, 0
    %p90 = por %p88, %p89
    %p91 = scmp.ne.s32.totalorder %s80, %s83
    %p92 = scmp.eq.s32.totalorder %s23, 1
    %p93 = por %p91, %p92
    %p94 = scmp.ne.s32.totalorder %s83, %s84
    %p95 = scmp.eq.s32.totalorder %s23, 0
    %p96 = por %p94, %p95
    %p97 = scmp.ne.s32.totalorder %s83, %s84
    %p98 = scmp.eq.s32.totalorder %s24, 1
    %p99 = por %p97, %p98
    %p101 = scmp.ne.s32.totalorder %s84, %s100
    %p102 = scmp.eq.s32.totalorder %s24, 0
    %p103 = por %p101, %p102
    %s105 = sadd.s32 %s104, 1
    %p108 = scmp.eq.s32.totalorder %s18, 1
    %p109 = scmp.ne.s32.totalorder %s104, %s106
    %p110 = scmp.eq.s32.totalorder %s18, 0
    %p111 = por %p109, %p110
    %p112 = scmp.ne.s32.totalorder %s104, %s106
    %p113 = scmp.eq.s32.totalorder %s23, 1
    %p114 = por %p112, %p113
    %p115 = scmp.ne.s32.totalorder %s106, %s107
    %p116 = scmp.eq.s32.totalorder %s23, 0
    %p117 = por %p115, %p116
    %p118 = scmp.ne.s32.totalorder %s106, %s107
    %p119 = scmp.eq.s32.totalorder %s24, 1
    %p120 = por %p118, %p119
    %p122 = scmp.ne.s32.totalorder %s107, %s121
    %p123 = scmp.eq.s32.totalorder %s24, 0
    %p124 = por %p122, %p123
    %s126 = sadd.s32 %s125, 1
    %p129 = scmp.eq.s32.totalorder %s18, 1
    %p130 = scmp.ne.s32.totalorder %s125, %s127
    %p131 = scmp.eq.s32.totalorder %s18, 0
    %p132 = por %p130, %p131
    %p133 = scmp.ne.s32.totalorder %s125, %s127
    %p134 = scmp.eq.s32.totalorder %s23, 1
    %p135 = por %p133, %p134
    %p136 = scmp.ne.s32.totalorder %s127, %s128
    %p137 = scmp.eq.s32.totalorder %s23, 0
    %p138 = por %p136, %p137
    %p139 = scmp.ne.s32.totalorder %s127, %s128
    %p140 = scmp.eq.s32.totalorder %s24, 1
    %p141 = por %p139, %p140
    %p143 = scmp.ne.s32.totalorder %s128, %s142
    %p144 = scmp.eq.s32.totalorder %s24, 0
    %p145 = por %p143, %p144
    %s147 = sadd.s32 %s146, 1
    %p150 = scmp.eq.s32.totalorder %s18, 1
    %p151 = scmp.ne.s32.totalorder %s146, %s148
    %p152 = scmp.eq.s32.totalorder %s18, 0
    %p153 = por %p151, %p152
    %p154 = scmp.ne.s32.totalorder %s146, %s148
    %p155 = scmp.eq.s32.totalorder %s23, 1
    %p156 = por %p154, %p155
    %p157 = scmp.ne.s32.totalorder %s148, %s149
    %p158 = scmp.eq.s32.totalorder %s23, 0
    %p159 = por %p157, %p158
    %p160 = scmp.ne.s32.totalorder %s148, %s149
    %p161 = scmp.eq.s32.totalorder %s24, 1
    %p162 = por %p160, %p161
    %p164 = scmp.ne.s32.totalorder %s149, %s163
    %p165 = scmp.eq.s32.totalorder %s24, 0
    %p166 = por %p164, %p165
    %s168 = sadd.s32 %s167, 1
    %p171 = scmp.eq.s32.totalorder %s18, 1
    %p172 = scmp.ne.s32.totalorder %s167, %s169
    %p173 = scmp.eq.s32.totalorder %s18, 0
    %p174 = por %p172, %p173
    %p175 = scmp.ne.s32.totalorder %s167, %s169
    %p176 = scmp.eq.s32.totalorder %s23, 1
    %p177 = por %p175, %p176
    %p178 = scmp.ne.s32.totalorder %s169, %s170
    %p179 = scmp.eq.s32.totalorder %s23, 0
    %p180 = por %p178, %p179
    %p181 = scmp.ne.s32.totalorder %s169, %s170
    %p182 = scmp.eq.s32.totalorder %s24, 1
    %p183 = por %p181, %p182
    %p185 = scmp.ne.s32.totalorder %s170, %s184
    %p186 = scmp.eq.s32.totalorder %s24, 0
    %p187 = por %p185, %p186
    %s189 = sadd.s32 %s188, 1
    %p192 = scmp.eq.s32.totalorder %s18, 1
    %p193 = scmp.ne.s32.totalorder %s188, %s190
    %p194 = scmp.eq.s32.totalorder %s18, 0
    %p195 = por %p193, %p194
    %p196 = scmp.ne.s32.totalorder %s188, %s190
    %p197 = scmp.eq.s32.totalorder %s23, 1
    %p198 = por %p196, %p197
    %p199 = scmp.ne.s32.totalorder %s190, %s191
    %p200 = scmp.eq.s32.totalorder %s23, 0
    %p201 = por %p199, %p200
    %p202 = scmp.ne.s32.totalorder %s190, %s191
    %p203 = scmp.eq.s32.totalorder %s24, 1
    %p204 = por %p202, %p203
    %p206 = scmp.ne.s32.totalorder %s191, %s205
    %p207 = scmp.eq.s32.totalorder %s24, 0
    %p208 = por %p206, %p207
    %s210 = sadd.s32 %s209, 1
    %p213 = scmp.eq.s32.totalorder %s18, 1
    %p214 = scmp.ne.s32.totalorder %s209, %s211
    %p215 = scmp.eq.s32.totalorder %s18, 0
    %p216 = por %p214, %p215
    %p217 = scmp.ne.s32.totalorder %s209, %s211
    %p218 = scmp.eq.s32.totalorder %s23, 1
    %p219 = por %p217, %p218
    %p220 = scmp.ne.s32.totalorder %s211, %s212
    %p221 = scmp.eq.s32.totalorder %s23, 0
    %p222 = por %p220, %p221
    %p223 = scmp.ne.s32.totalorder %s211, %s212
    %p224 = scmp.eq.s32.totalorder %s24, 1
    %p225 = por %p223, %p224
    %p227 = scmp.ne.s32.totalorder %s212, %s226
    %p228 = scmp.eq.s32.totalorder %s24, 0
    %p229 = por %p227, %p228
    %s231 = sadd.s32 %s230, 1
    %p234 = scmp.eq.s32.totalorder %s18, 1
    %p235 = scmp.ne.s32.totalorder %s230, %s232
    %p236 = scmp.eq.s32.totalorder %s18, 0
    %p237 = por %p235, %p236
    %p238 = scmp.ne.s32.totalorder %s230, %s232
    %p239 = scmp.eq.s32.totalorder %s23, 1
    %p240 = por %p238, %p239
    %p241 = scmp.ne.s32.totalorder %s232, %s233
    %p242 = scmp.eq.s32.totalorder %s23, 0
    %p243 = por %p241, %p242
    %p244 = scmp.ne.s32.totalorder %s232, %s233
    %p245 = scmp.eq.s32.totalorder %s24, 1
    %p246 = por %p244, %p245
    %p248 = scmp.ne.s32.totalorder %s233, %s247
    %p249 = scmp.eq.s32.totalorder %s24, 0
    %p250 = por %p248, %p249
    %s251 = ssub.s32 %s18, %s25
    %p252 = scmp.eq.s32.totalorder %s251, 0
    %s254 = sadd.s32 %s253, 1
    %s255 = scalar_select %p252, %s253, %s254
    %p258 = pneg %p252
    %p259 = scmp.eq.s32.totalorder %s18, 1
    %p260 = por %p258, %p259
    %p261 = scmp.ne.s32.totalorder %s253, %s256
    %p262 = scmp.eq.s32.totalorder %s18, 0
    %p263 = por %p261, %p262
    %p264 = scmp.ne.s32.totalorder %s253, %s256
    %p265 = scmp.eq.s32.totalorder %s23, 1
    %p266 = por %p264, %p265
    %p267 = scmp.ne.s32.totalorder %s256, %s257
    %p268 = scmp.eq.s32.totalorder %s23, 0
    %p269 = por %p267, %p268
    %p270 = scmp.ne.s32.totalorder %s256, %s257
    %p271 = scmp.eq.s32.totalorder %s24, 1
    %p272 = por %p270, %p271
    %p274 = scmp.ne.s32.totalorder %s257, %s273
    %p275 = scmp.eq.s32.totalorder %s24, 0
    %p276 = por %p274, %p275
    %s277 = ssub.s32 %s18, %s25
    %p278 = scmp.eq.s32.totalorder %s277, 0
    %s280 = sadd.s32 %s279, 1
    %s281 = scalar_select %p278, %s279, %s280
    %p284 = pneg %p278
    %p285 = scmp.eq.s32.totalorder %s18, 1
    %p286 = por %p284, %p285
    %p287 = scmp.ne.s32.totalorder %s279, %s282
    %p288 = scmp.eq.s32.totalorder %s18, 0
    %p289 = por %p287, %p288
    %p290 = scmp.ne.s32.totalorder %s279, %s282
    %p291 = scmp.eq.s32.totalorder %s23, 1
    %p292 = por %p290, %p291
    %p293 = scmp.ne.s32.totalorder %s282, %s283
    %p294 = scmp.eq.s32.totalorder %s23, 0
    %p295 = por %p293, %p294
    %p296 = scmp.ne.s32.totalorder %s282, %s283
    %p297 = scmp.eq.s32.totalorder %s24, 1
    %p298 = por %p296, %p297
    %p300 = scmp.ne.s32.totalorder %s283, %s299
    %p301 = scmp.eq.s32.totalorder %s24, 0
    %p302 = por %p300, %p301
    %p303 = scmp.le.s32.totalorder 1, %s18
    %p304 = scmp.lt.s32.totalorder %s18, 3
    %p305 = pnand %p303, %p304
    %p306 = pneg %p305
    // Predicated region
    $region9: #{tpu_custom_call.1} parent=5 // pred_check
      _
    $region10: #{tpu_custom_call.1} parent=5 // pred_check_branch
      %308 = sbr.rel (%p305) target = $region12
    $region11: #{tpu_custom_call.1} parent=5 // pred_region
      %s309 = ssub.s32 %s18, 1
      // Predicated region
      $region13: #{tpu_custom_call.1} parent=11 // pred_check
        %p310 = pneg %p117
      $region14: #{tpu_custom_call.1} parent=11 // pred_check_branch
        %312 = sbr.rel (%p310) target = $region16
      $region15: #{tpu_custom_call.1} parent=11 // pred_region
        _
      $region16: #{tpu_custom_call.1} parent=11 // pred_fallthru
        _
      // Predicated region
      $region17: #{tpu_custom_call.1} parent=11 // pred_check
        %p313 = pneg %p138
      $region18: #{tpu_custom_call.1} parent=11 // pred_check_branch
        %315 = sbr.rel (%p313) target = $region20
      $region19: #{tpu_custom_call.1} parent=11 // pred_region
        _
      $region20: #{tpu_custom_call.1} parent=11 // pred_fallthru
        _
      // Predicated region
      $region21: #{tpu_custom_call.1} parent=11 // pred_check
        %p316 = pneg %p159
      $region22: #{tpu_custom_call.1} parent=11 // pred_check_branch
        %318 = sbr.rel (%p316) target = $region24
      $region23: #{tpu_custom_call.1} parent=11 // pred_region
        _
      $region24: #{tpu_custom_call.1} parent=11 // pred_fallthru
        _
      // Predicated region
      $region25: #{tpu_custom_call.1} parent=11 // pred_check
        %p319 = pneg %p180
      $region26: #{tpu_custom_call.1} parent=11 // pred_check_branch
        %321 = sbr.rel (%p319) target = $region28
      $region27: #{tpu_custom_call.1} parent=11 // pred_region
        _
      $region28: #{tpu_custom_call.1} parent=11 // pred_fallthru
        _
      // Predicated region
      $region29: #{tpu_custom_call.1} parent=11 // pred_check
        %p322 = pneg %p201
      $region30: #{tpu_custom_call.1} parent=11 // pred_check_branch
        %324 = sbr.rel (%p322) target = $region32
      $region31: #{tpu_custom_call.1} parent=11 // pred_region
        _
      $region32: #{tpu_custom_call.1} parent=11 // pred_fallthru
        _
      // Predicated region
      $region33: #{tpu_custom_call.1} parent=11 // pred_check
        %p325 = pneg %p222
      $region34: #{tpu_custom_call.1} parent=11 // pred_check_branch
        %327 = sbr.rel (%p325) target = $region36
      $region35: #{tpu_custom_call.1} parent=11 // pred_region
        _
      $region36: #{tpu_custom_call.1} parent=11 // pred_fallthru
        _
      // Predicated region
      $region37: #{tpu_custom_call.1} parent=11 // pred_check
        %p328 = pneg %p243
      $region38: #{tpu_custom_call.1} parent=11 // pred_check_branch
        %330 = sbr.rel (%p328) target = $region40
      $region39: #{tpu_custom_call.1} parent=11 // pred_region
        _
      $region40: #{tpu_custom_call.1} parent=11 // pred_fallthru
        _
    $region12: #{tpu_custom_call.1} parent=5 // pred_fallthru
      _
    %p331 = scmp.lt.s32.totalorder %s18, 2
    // Predicated region
    $region41: #{tpu_custom_call.1} parent=5 // pred_check
      %p332 = pneg %p331
    $region42: #{tpu_custom_call.1} parent=5 // pred_check_branch
      %334 = sbr.rel (%p332) target = $region44
    $region43: #{tpu_custom_call.1} parent=5 // pred_region
      // Predicated region
      $region45: #{tpu_custom_call.1} parent=43 // pred_check
        %p335 = pneg %p38
      $region46: #{tpu_custom_call.1} parent=43 // pred_check_branch
        %337 = sbr.rel (%p335) target = $region48
      $region47: #{tpu_custom_call.1} parent=43 // pred_region
        %p338 = scmp.lt.s32.totalorder %s18, 1
        %s339 = scalar_select %p338, %s18, 1
        %s340 = smul.addr %s339, 4
        %s341 = scalar_lea.vmem %s0, %s340
      $region48: #{tpu_custom_call.1} parent=43 // pred_fallthru
        _
      // Predicated region
      $region49: #{tpu_custom_call.1} parent=43 // pred_check
        %p342 = pneg %p64
      $region50: #{tpu_custom_call.1} parent=43 // pred_check_branch
        %344 = sbr.rel (%p342) target = $region52
      $region51: #{tpu_custom_call.1} parent=43 // pred_region
        %p345 = scmp.lt.s32.totalorder %s18, 1
        %s346 = scalar_select %p345, %s18, 1
        %s347 = scalar_lea.vmem %s1, %s346
      $region52: #{tpu_custom_call.1} parent=43 // pred_fallthru
        _
      // Predicated region
      $region53: #{tpu_custom_call.1} parent=43 // pred_check
        %p348 = pneg %p90
      $region54: #{tpu_custom_call.1} parent=43 // pred_check_branch
        %350 = sbr.rel (%p348) target = $region56
      $region55: #{tpu_custom_call.1} parent=43 // pred_region
        %p351 = scmp.lt.s32.totalorder %s18, 1
        %s352 = scalar_select %p351, %s18, 1
        %s353 = smul.addr %s352, 16
        %s354 = smul.addr %s353, 8
        %s355 = scalar_lea.vmem %s2, %s354
      $region56: #{tpu_custom_call.1} parent=43 // pred_fallthru
        _
    $region44: #{tpu_custom_call.1} parent=5 // pred_fallthru
      _
    %p356 = scmp.le.s32.totalorder 1, %s18
    %p357 = scmp.lt.s32.totalorder %s18, 3
    %p358 = pnand %p356, %p357
    %p359 = pneg %p358
    // Predicated region
    $region57: #{tpu_custom_call.1} parent=5 // pred_check
      _
    $region58: #{tpu_custom_call.1} parent=5 // pred_check_branch
      %361 = sbr.rel (%p358) target = $region60
    $region59: #{tpu_custom_call.1} parent=5 // pred_region
      %s362 = ssub.s32 %s18, 1
      %p363 = scmp.lt.s32.totalorder %s23, 1
      %s364 = scalar_select %p363, %s23, 1
      %s365 = smul.addr %s364, 4
      %s366 = scalar_lea.vmem %s0, %s365
      %p367 = pneg %p44
      %p368 = pneg %p41
      %p369 = scmp.lt.s32.totalorder %s23, 1
      %s370 = scalar_select %p369, %s23, 1
      %s371 = scalar_lea.vmem %s1, %s370
      %p372 = pneg %p70
      %p373 = pneg %p67
      %p374 = scmp.lt.s32.totalorder %s23, 1
      %s375 = scalar_select %p374, %s23, 1
      %s376 = smul.addr %s375, 16
      %s377 = smul.addr %s376, 8
      %s378 = scalar_lea.vmem %s2, %s377
      %p379 = pneg %p96
      %p380 = pneg %p93
      %p381 = pneg %p117
      %p382 = pneg %p114
      %p383 = pneg %p138
      %p384 = pneg %p135
      %p385 = pneg %p159
      %p386 = pneg %p156
      %p387 = pneg %p180
      %p388 = pneg %p177
      %p389 = pneg %p201
      %p390 = pneg %p198
      %p391 = pneg %p222
      %p392 = pneg %p219
      %p393 = pneg %p243
      %p394 = pneg %p240
      %p395 = pneg %p269
      %p396 = pneg %p266
      %p397 = scmp.lt.s32.totalorder %s23, 1
      %s398 = scalar_select %p397, %s23, 1
      %s399 = smul.addr %s398, 4
      %s400 = smul.addr %s399, 8
      %s401 = scalar_lea.vmem %s10, %s400
      %p402 = pneg %p295
      %p403 = pneg %p292
      %p404 = scmp.lt.s32.totalorder %s23, 1
      %s405 = scalar_select %p404, %s23, 1
      %s406 = smul.addr %s405, 4
      %s407 = smul.addr %s406, 8
      %s408 = scalar_lea.vmem %s11, %s407
      %p409 = scmp.lt.s32.totalorder %s23, 1
      %s410 = scalar_select %p409, %s23, 1
      %s411 = smul.addr %s410, 4
      %s412 = scalar_lea.vmem %s0, %s411
      %p413 = scmp.lt.s32.totalorder %s23, 1
      %s414 = scalar_select %p413, %s23, 1
      %s415 = scalar_lea.vmem %s1, %s414
      %p416 = scmp.lt.s32.totalorder %s23, 1
      %s417 = scalar_select %p416, %s23, 1
      %s418 = smul.addr %s417, 16
      %s419 = smul.addr %s418, 8
      %s420 = scalar_lea.vmem %s2, %s419
      %p421 = scmp.lt.s32.totalorder %s23, 1
      %s422 = scalar_select %p421, %s23, 1
      %s423 = smul.addr %s422, 4
      %s424 = smul.addr %s423, 8
      %s425 = scalar_lea.vmem %s10, %s424
      %p426 = scmp.lt.s32.totalorder %s23, 1
      %s427 = scalar_select %p426, %s23, 1
      %s428 = smul.addr %s427, 4
      %s429 = smul.addr %s428, 8
      %s430 = scalar_lea.vmem %s11, %s429
      %v432 = vld [vmem:[%s412] sm:$0x7]
      %v433 = vld [vmem:[%s415] sm:$0x1]
      %v434 = vld [vmem:[%s3] sm:$0xf]
      %v435 = vld [vmem:[%s3 + $0x4] sm:$0xf]
      %v436 = vld [vmem:[%s3 + $0x8] sm:$0xf]
      %v437 = vld [vmem:[%s3 + $0xc] sm:$0xf]
      %v438 = vld [vmem:[%s3 + $0x10] sm:$0xf]
      %v439 = vld [vmem:[%s3 + $0x14] sm:$0xf]
      %v440 = vld [vmem:[%s3 + $0x18] sm:$0xf]
      %v441 = vld [vmem:[%s3 + $0x1c] sm:$0xf]
      %v442 = vld [vmem:[%s3 + $0x20] sm:$0xf]
      %v443 = vld [vmem:[%s3 + $0x24] sm:$0xf]
      %v444 = vld [vmem:[%s3 + $0x28] sm:$0xf]
      %v445 = vld [vmem:[%s3 + $0x2c] sm:$0xf]
      %v446 = vld [vmem:[%s3 + $0x30] sm:$0xf]
      %v447 = vld [vmem:[%s3 + $0x34] sm:$0xf]
      %v448 = vld [vmem:[%s3 + $0x38] sm:$0xf]
      %v449 = vld [vmem:[%s3 + $0x3c] sm:$0xf]
      %v450 = vld [vmem:[%s4] sm:$0xff]
      %v451 = vld [vmem:[%s4 + $0x8] sm:$0xff]
      %v452 = vld [vmem:[%s4 + $0x10] sm:$0xff]
      %v453 = vld [vmem:[%s4 + $0x18] sm:$0xff]
      %v454 = vld [vmem:[%s4 + $0x20] sm:$0xff]
      %v455 = vld [vmem:[%s4 + $0x28] sm:$0xff]
      %v456 = vld [vmem:[%s4 + $0x30] sm:$0xff]
      %v457 = vld [vmem:[%s4 + $0x38] sm:$0xff]
      %v458 = vld [vmem:[%s4 + $0x40] sm:$0xff]
      %v459 = vld [vmem:[%s4 + $0x48] sm:$0xff]
      %v460 = vld [vmem:[%s4 + $0x50] sm:$0xff]
      %v461 = vld [vmem:[%s4 + $0x58] sm:$0xff]
      %v462 = vld [vmem:[%s4 + $0x60] sm:$0xff]
      %v463 = vld [vmem:[%s4 + $0x68] sm:$0xff]
      %v464 = vld [vmem:[%s4 + $0x70] sm:$0xff]
      %v465 = vld [vmem:[%s4 + $0x78] sm:$0xff]
      %v466 = vld [vmem:[%s5] sm:$0xf]
      %v467 = vld [vmem:[%s5 + $0x4] sm:$0xf]
      %v468 = vld [vmem:[%s5 + $0x8] sm:$0xf]
      %v469 = vld [vmem:[%s5 + $0xc] sm:$0xf]
      %v470 = vld [vmem:[%s5 + $0x10] sm:$0xf]
      %v471 = vld [vmem:[%s5 + $0x14] sm:$0xf]
      %v472 = vld [vmem:[%s5 + $0x18] sm:$0xf]
      %v473 = vld [vmem:[%s5 + $0x1c] sm:$0xf]
      %v474 = vld [vmem:[%s5 + $0x20] sm:$0xf]
      %v475 = vld [vmem:[%s5 + $0x24] sm:$0xf]
      %v476 = vld [vmem:[%s5 + $0x28] sm:$0xf]
      %v477 = vld [vmem:[%s5 + $0x2c] sm:$0xf]
      %v478 = vld [vmem:[%s5 + $0x30] sm:$0xf]
      %v479 = vld [vmem:[%s5 + $0x34] sm:$0xf]
      %v480 = vld [vmem:[%s5 + $0x38] sm:$0xf]
      %v481 = vld [vmem:[%s5 + $0x3c] sm:$0xf]
      %v482 = vld [vmem:[%s6] sm:$0xf]
      %v483 = vld [vmem:[%s6 + $0x4] sm:$0xf]
      %v484 = vld [vmem:[%s6 + $0x8] sm:$0xf]
      %v485 = vld [vmem:[%s6 + $0xc] sm:$0xf]
      %v486 = vld [vmem:[%s6 + $0x10] sm:$0xf]
      %v487 = vld [vmem:[%s6 + $0x14] sm:$0xf]
      %v488 = vld [vmem:[%s6 + $0x18] sm:$0xf]
      %v489 = vld [vmem:[%s6 + $0x1c] sm:$0xf]
      %v490 = vld [vmem:[%s6 + $0x20] sm:$0xf]
      %v491 = vld [vmem:[%s6 + $0x24] sm:$0xf]
      %v492 = vld [vmem:[%s6 + $0x28] sm:$0xf]
      %v493 = vld [vmem:[%s6 + $0x2c] sm:$0xf]
      %v494 = vld [vmem:[%s6 + $0x30] sm:$0xf]
      %v495 = vld [vmem:[%s6 + $0x34] sm:$0xf]
      %v496 = vld [vmem:[%s6 + $0x38] sm:$0xf]
      %v497 = vld [vmem:[%s6 + $0x3c] sm:$0xf]
      %v498 = vld [vmem:[%s7] sm:$0xff]
      %v499 = vld [vmem:[%s7 + $0x8] sm:$0xff]
      %v500 = vld [vmem:[%s7 + $0x10] sm:$0xff]
      %v501 = vld [vmem:[%s7 + $0x18] sm:$0xff]
      %v502 = vld [vmem:[%s7 + $0x20] sm:$0xff]
      %v503 = vld [vmem:[%s7 + $0x28] sm:$0xff]
      %v504 = vld [vmem:[%s7 + $0x30] sm:$0xff]
      %v505 = vld [vmem:[%s7 + $0x38] sm:$0xff]
      %v506 = vld [vmem:[%s7 + $0x40] sm:$0xff]
      %v507 = vld [vmem:[%s7 + $0x48] sm:$0xff]
      %v508 = vld [vmem:[%s7 + $0x50] sm:$0xff]
      %v509 = vld [vmem:[%s7 + $0x58] sm:$0xff]
      %v510 = vld [vmem:[%s7 + $0x60] sm:$0xff]
      %v511 = vld [vmem:[%s7 + $0x68] sm:$0xff]
      %v512 = vld [vmem:[%s7 + $0x70] sm:$0xff]
      %v513 = vld [vmem:[%s7 + $0x78] sm:$0xff]
      %v514 = vld [vmem:[%s420] sm:$0xff]
      %v515 = vld [vmem:[%s420 + $0x8] sm:$0xff]
      %v516 = vld [vmem:[%s420 + $0x10] sm:$0xff]
      %v517 = vld [vmem:[%s420 + $0x18] sm:$0xff]
      %v518 = vld [vmem:[%s420 + $0x20] sm:$0xff]
      %v519 = vld [vmem:[%s420 + $0x28] sm:$0xff]
      %v520 = vld [vmem:[%s420 + $0x30] sm:$0xff]
      %v521 = vld [vmem:[%s420 + $0x38] sm:$0xff]
      %523 = vset.pattern.permute.xlu0 3
      %524 = vperm.xlu0 %523, %v514
      %v525 = vpop.permute.xlu0 %524
      %528 = vset.pattern.permute.xlu0 3
      %529 = vperm.xlu0 %528, %v515
      %v530 = vpop.permute.xlu0 %529
      %533 = vset.pattern.permute.xlu0 3
      %534 = vperm.xlu0 %533, %v516
      %v535 = vpop.permute.xlu0 %534
      %538 = vset.pattern.permute.xlu0 3
      %539 = vperm.xlu0 %538, %v517
      %v540 = vpop.permute.xlu0 %539
      %543 = vset.pattern.permute.xlu0 3
      %544 = vperm.xlu0 %543, %v518
      %v545 = vpop.permute.xlu0 %544
      %548 = vset.pattern.permute.xlu0 3
      %549 = vperm.xlu0 %548, %v519
      %v550 = vpop.permute.xlu0 %549
      %553 = vset.pattern.permute.xlu0 3
      %554 = vperm.xlu0 %553, %v520
      %v555 = vpop.permute.xlu0 %554
      %558 = vset.pattern.permute.xlu0 3
      %559 = vperm.xlu0 %558, %v521
      %v560 = vpop.permute.xlu0 %559
      %vm562 = vcmask 23552
      %v563 = vsel %vm562, %v514, 0
      %v565 = vsel %vm562, %v515, 0
      %v567 = vsel %vm562, %v516, 0
      %v569 = vsel %vm562, %v517, 0
      %v571 = vsel %vm562, %v518, 0
      %v573 = vsel %vm562, %v519, 0
      %v575 = vsel %vm562, %v520, 0
      %v577 = vsel %vm562, %v521, 0
      %vm579 = vcmask 1042432
      %v581 = vsel %vm579, %v432, 0
      %583 = vmatpush.msra.mxu0 0.0
      %584 = vmatpush.msra.mxu0 0.0
      %585 = vmatpush.msra.mxu0 0.0
      %586 = vmatpush.msra.mxu0 0.0
      %587 = vmatpush.msra.mxu0 0.0
      %588 = vmatpush.msra.mxu0 0.0
      %589 = vmatpush.msra.mxu0 0.0
      %590 = vmatpush.msra.mxu0 0.0
      %591 = vmatpush.msra.mxu0 0.0
      %592 = vmatpush.msra.mxu0 0.0
      %593 = vmatpush.msra.mxu0 0.0
      %594 = vmatpush.msra.mxu0 0.0
      %595 = vmatpush.msra.mxu0 0.0
      %596 = vmatpush.msra.mxu0 0.0
      %597 = vmatpush.msra.mxu0 0.0
      %598 = vmatpush.msra.mxu0 %v581
      %599 = vmatmul.f32.gmra.mxu0 %v563
      %v600 = vpop.f32.mrf.mxu0
      %v601 = vadd.f32 %v525, %v600
      %602 = vmatmul.f32.gmra.mxu0 %v565
      %v603 = vpop.f32.mrf.mxu0
      %v604 = vadd.f32 %v530, %v603
      %605 = vmatmul.f32.gmra.mxu0 %v567
      %v606 = vpop.f32.mrf.mxu0
      %v607 = vadd.f32 %v535, %v606
      %608 = vmatmul.f32.gmra.mxu0 %v569
      %v609 = vpop.f32.mrf.mxu0
      %v610 = vadd.f32 %v540, %v609
      %611 = vmatmul.f32.gmra.mxu0 %v571
      %v612 = vpop.f32.mrf.mxu0
      %v613 = vadd.f32 %v545, %v612
      %614 = vmatmul.f32.gmra.mxu0 %v573
      %v615 = vpop.f32.mrf.mxu0
      %v616 = vadd.f32 %v550, %v615
      %617 = vmatmul.f32.gmra.mxu0 %v575
      %v618 = vpop.f32.mrf.mxu0
      %v619 = vadd.f32 %v555, %v618
      %620 = vmatmul.f32.gmra.mxu0 %v577
      %v621 = vpop.f32.mrf.mxu0
      %v622 = vadd.f32 %v560, %v621
      %623 = vdwg.mxu0
      %v624 = vmax.f32 %v601, 0.0
      %v625 = vmax.f32 %v604, 0.0
      %v626 = vmax.f32 %v607, 0.0
      %v627 = vmax.f32 %v610, 0.0
      %v628 = vmax.f32 %v613, 0.0
      %v629 = vmax.f32 %v616, 0.0
      %v630 = vmax.f32 %v619, 0.0
      %v631 = vmax.f32 %v622, 0.0
      %v632 = vpack.c.bf16 %v625, %v624
      %v633 = vpack.c.bf16 %v627, %v626
      %v634 = vpack.c.bf16 %v629, %v628
      %v635 = vpack.c.bf16 %v631, %v630
      %637 = vset.pattern.permute.xlu0 0
      %638 = vperm.xlu0 %637, %v450
      %v639 = vpop.permute.xlu0 %638
      %642 = vset.pattern.permute.xlu0 0
      %643 = vperm.xlu0 %642, %v451
      %v644 = vpop.permute.xlu0 %643
      %647 = vset.pattern.permute.xlu0 0
      %648 = vperm.xlu0 %647, %v452
      %v649 = vpop.permute.xlu0 %648
      %652 = vset.pattern.permute.xlu0 0
      %653 = vperm.xlu0 %652, %v453
      %v654 = vpop.permute.xlu0 %653
      %657 = vset.pattern.permute.xlu0 0
      %658 = vperm.xlu0 %657, %v454
      %v659 = vpop.permute.xlu0 %658
      %662 = vset.pattern.permute.xlu0 0
      %663 = vperm.xlu0 %662, %v455
      %v664 = vpop.permute.xlu0 %663
      %667 = vset.pattern.permute.xlu0 0
      %668 = vperm.xlu0 %667, %v456
      %v669 = vpop.permute.xlu0 %668
      %672 = vset.pattern.permute.xlu0 0
      %673 = vperm.xlu0 %672, %v457
      %v674 = vpop.permute.xlu0 %673
      %677 = vset.pattern.permute.xlu0 0
      %678 = vperm.xlu0 %677, %v458
      %v679 = vpop.permute.xlu0 %678
      %682 = vset.pattern.permute.xlu0 0
      %683 = vperm.xlu0 %682, %v459
      %v684 = vpop.permute.xlu0 %683
      %687 = vset.pattern.permute.xlu0 0
      %688 = vperm.xlu0 %687, %v460
      %v689 = vpop.permute.xlu0 %688
      %692 = vset.pattern.permute.xlu0 0
      %693 = vperm.xlu0 %692, %v461
      %v694 = vpop.permute.xlu0 %693
      %697 = vset.pattern.permute.xlu0 0
      %698 = vperm.xlu0 %697, %v462
      %v699 = vpop.permute.xlu0 %698
      %702 = vset.pattern.permute.xlu0 0
      %703 = vperm.xlu0 %702, %v463
      %v704 = vpop.permute.xlu0 %703
      %707 = vset.pattern.permute.xlu0 0
      %708 = vperm.xlu0 %707, %v464
      %v709 = vpop.permute.xlu0 %708
      %712 = vset.pattern.permute.xlu0 0
      %713 = vperm.xlu0 %712, %v465
      %v714 = vpop.permute.xlu0 %713
      %v732 = vunpack.c.l.b16 %v434
      %v733 = vunpack.c.l.b16 %v435
      %v734 = vunpack.c.l.b16 %v436
      %v735 = vunpack.c.l.b16 %v437
      %v736 = vunpack.c.l.b16 %v438
      %v737 = vunpack.c.l.b16 %v439
      %v738 = vunpack.c.l.b16 %v440
      %v739 = vunpack.c.l.b16 %v441
      %v740 = vunpack.c.l.b16 %v442
      %v741 = vunpack.c.l.b16 %v443
      %v742 = vunpack.c.l.b16 %v444
      %v743 = vunpack.c.l.b16 %v445
      %v744 = vunpack.c.l.b16 %v446
      %v745 = vunpack.c.l.b16 %v447
      %v746 = vunpack.c.l.b16 %v448
      %v747 = vunpack.c.l.b16 %v449
      %v748 = vpack.c.b16 %v733, %v732
      %v749 = vpack.c.b16 %v735, %v734
      %v750 = vpack.c.b16 %v737, %v736
      %v751 = vpack.c.b16 %v739, %v738
      %v752 = vpack.c.b16 %v741, %v740
      %v753 = vpack.c.b16 %v743, %v742
      %v754 = vpack.c.b16 %v745, %v744
      %v755 = vpack.c.b16 %v747, %v746
      %vm756 = vcmask 523264
      %v758 = vsel %vm756, %v748, 0
      %v761 = vsel %vm756, %v749, 0
      %v764 = vsel %vm756, %v750, 0
      %v767 = vsel %vm756, %v751, 0
      %v770 = vsel %vm756, %v752, 0
      %v773 = vsel %vm756, %v753, 0
      %v776 = vsel %vm756, %v754, 0
      %v779 = vsel %vm756, %v755, 0
      %781 = vmatpush.bf16.msra.mxu0 0
      %782 = vmatpush.bf16.msra.mxu0 0
      %783 = vmatpush.bf16.msra.mxu0 0
      %784 = vmatpush.bf16.msra.mxu0 0
      %785 = vmatpush.bf16.msra.mxu0 %v635
      %786 = vmatpush.bf16.msra.mxu0 %v634
      %787 = vmatpush.bf16.msra.mxu0 %v633
      %788 = vmatpush.bf16.msra.mxu0 %v632
      %789 = vmatmul.bf16.gmra.mxu0 %v758
      %v790 = vpop.f32.mrf.mxu0
      %v791 = vadd.f32 %v639, %v790
      %v792 = vpop.f32.mrf.mxu0
      %v793 = vadd.f32 %v644, %v792
      %794 = vmatmul.bf16.gmra.mxu0 %v761
      %v795 = vpop.f32.mrf.mxu0
      %v796 = vadd.f32 %v649, %v795
      %v797 = vpop.f32.mrf.mxu0
      %v798 = vadd.f32 %v654, %v797
      %799 = vmatmul.bf16.gmra.mxu0 %v764
      %v800 = vpop.f32.mrf.mxu0
      %v801 = vadd.f32 %v659, %v800
      %v802 = vpop.f32.mrf.mxu0
      %v803 = vadd.f32 %v664, %v802
      %804 = vmatmul.bf16.gmra.mxu0 %v767
      %v805 = vpop.f32.mrf.mxu0
      %v806 = vadd.f32 %v669, %v805
      %v807 = vpop.f32.mrf.mxu0
      %v808 = vadd.f32 %v674, %v807
      %809 = vmatmul.bf16.gmra.mxu0 %v770
      %v810 = vpop.f32.mrf.mxu0
      %v811 = vadd.f32 %v679, %v810
      %v812 = vpop.f32.mrf.mxu0
      %v813 = vadd.f32 %v684, %v812
      %814 = vmatmul.bf16.gmra.mxu0 %v773
      %v815 = vpop.f32.mrf.mxu0
      %v816 = vadd.f32 %v689, %v815
      %v817 = vpop.f32.mrf.mxu0
      %v818 = vadd.f32 %v694, %v817
      %819 = vmatmul.bf16.gmra.mxu0 %v776
      %v820 = vpop.f32.mrf.mxu0
      %v821 = vadd.f32 %v699, %v820
      %v822 = vpop.f32.mrf.mxu0
      %v823 = vadd.f32 %v704, %v822
      %824 = vmatmul.bf16.gmra.mxu0 %v779
      %v825 = vpop.f32.mrf.mxu0
      %v826 = vadd.f32 %v709, %v825
      %v827 = vpop.f32.mrf.mxu0
      %v828 = vadd.f32 %v714, %v827
      %829 = vdwg.mxu0
      %v830 = vmax.f32 %v791, 0.0
      %v831 = vmax.f32 %v793, 0.0
      %v832 = vmax.f32 %v796, 0.0
      %v833 = vmax.f32 %v798, 0.0
      %v834 = vmax.f32 %v801, 0.0
      %v835 = vmax.f32 %v803, 0.0
      %v836 = vmax.f32 %v806, 0.0
      %v837 = vmax.f32 %v808, 0.0
      %v838 = vmax.f32 %v811, 0.0
      %v839 = vmax.f32 %v813, 0.0
      %v840 = vmax.f32 %v816, 0.0
      %v841 = vmax.f32 %v818, 0.0
      %v842 = vmax.f32 %v821, 0.0
      %v843 = vmax.f32 %v823, 0.0
      %v844 = vmax.f32 %v826, 0.0
      %v845 = vmax.f32 %v828, 0.0
      %846 = vmax.xlane.f32.xlu0 %v830
      %v847 = vpop.xlane.xlu0 %846
      %848 = vmax.xlane.f32.xlu0 %v831
      %v849 = vpop.xlane.xlu0 %848
      %850 = vmax.xlane.f32.xlu0 %v832
      %v851 = vpop.xlane.xlu0 %850
      %852 = vmax.xlane.f32.xlu0 %v833
      %v853 = vpop.xlane.xlu0 %852
      %854 = vmax.xlane.f32.xlu0 %v834
      %v855 = vpop.xlane.xlu0 %854
      %856 = vmax.xlane.f32.xlu0 %v835
      %v857 = vpop.xlane.xlu0 %856
      %858 = vmax.xlane.f32.xlu0 %v836
      %v859 = vpop.xlane.xlu0 %858
      %860 = vmax.xlane.f32.xlu0 %v837
      %v861 = vpop.xlane.xlu0 %860
      %862 = vmax.xlane.f32.xlu0 %v838
      %v863 = vpop.xlane.xlu0 %862
      %864 = vmax.xlane.f32.xlu0 %v839
      %v865 = vpop.xlane.xlu0 %864
      %866 = vmax.xlane.f32.xlu0 %v840
      %v867 = vpop.xlane.xlu0 %866
      %868 = vmax.xlane.f32.xlu0 %v841
      %v869 = vpop.xlane.xlu0 %868
      %870 = vmax.xlane.f32.xlu0 %v842
      %v871 = vpop.xlane.xlu0 %870
      %872 = vmax.xlane.f32.xlu0 %v843
      %v873 = vpop.xlane.xlu0 %872
      %874 = vmax.xlane.f32.xlu0 %v844
      %v875 = vpop.xlane.xlu0 %874
      %876 = vmax.xlane.f32.xlu0 %v845
      %v877 = vpop.xlane.xlu0 %876
      %v878 = vpack.c.bf16 %v831, %v830
      %v879 = vpack.c.bf16 %v833, %v832
      %v880 = vpack.c.bf16 %v835, %v834
      %v881 = vpack.c.bf16 %v837, %v836
      %v882 = vpack.c.bf16 %v839, %v838
      %v883 = vpack.c.bf16 %v841, %v840
      %v884 = vpack.c.bf16 %v843, %v842
      %v885 = vpack.c.bf16 %v845, %v844
      %v886 = vpack.c.bf16 %v849, %v847
      %v887 = vpack.c.bf16 %v853, %v851
      %v888 = vpack.c.bf16 %v857, %v855
      %v889 = vpack.c.bf16 %v861, %v859
      %v890 = vpack.c.bf16 %v865, %v863
      %v891 = vpack.c.bf16 %v869, %v867
      %v892 = vpack.c.bf16 %v873, %v871
      %v893 = vpack.c.bf16 %v877, %v875
      %v910 = vunpack.c.l.b16 %v482
      %v911 = vunpack.c.l.b16 %v483
      %v912 = vunpack.c.l.b16 %v484
      %v913 = vunpack.c.l.b16 %v485
      %v914 = vunpack.c.l.b16 %v486
      %v915 = vunpack.c.l.b16 %v487
      %v916 = vunpack.c.l.b16 %v488
      %v917 = vunpack.c.l.b16 %v489
      %v918 = vunpack.c.l.b16 %v490
      %v919 = vunpack.c.l.b16 %v491
      %v920 = vunpack.c.l.b16 %v492
      %v921 = vunpack.c.l.b16 %v493
      %v922 = vunpack.c.l.b16 %v494
      %v923 = vunpack.c.l.b16 %v495
      %v924 = vunpack.c.l.b16 %v496
      %v925 = vunpack.c.l.b16 %v497
      %v926 = vpack.c.b16 %v911, %v910
      %v927 = vpack.c.b16 %v913, %v912
      %v928 = vpack.c.b16 %v915, %v914
      %v929 = vpack.c.b16 %v917, %v916
      %v930 = vpack.c.b16 %v919, %v918
      %v931 = vpack.c.b16 %v921, %v920
      %v932 = vpack.c.b16 %v923, %v922
      %v933 = vpack.c.b16 %v925, %v924
      %942 = vmatpush.bf16.msra.mxu0 %v893
      %943 = vmatpush.bf16.msra.mxu0 %v892
      %944 = vmatpush.bf16.msra.mxu0 %v891
      %945 = vmatpush.bf16.msra.mxu0 %v890
      %946 = vmatpush.bf16.msra.mxu0 %v889
      %947 = vmatpush.bf16.msra.mxu0 %v888
      %948 = vmatpush.bf16.msra.mxu0 %v887
      %949 = vmatpush.bf16.msra.mxu0 %v886
      %950 = vmatmul.bf16.gmra.mxu0 %v926
      %v951 = vpop.f32.mrf.mxu0
      %v952 = vadd.f32 0.0, %v951
      %v953 = vpop.f32.mrf.mxu0
      %v954 = vadd.f32 0.0, %v953
      %955 = vmatmul.bf16.gmra.mxu0 %v927
      %v956 = vpop.f32.mrf.mxu0
      %v957 = vadd.f32 0.0, %v956
      %v958 = vpop.f32.mrf.mxu0
      %v959 = vadd.f32 0.0, %v958
      %960 = vmatmul.bf16.gmra.mxu0 %v928
      %v961 = vpop.f32.mrf.mxu0
      %v962 = vadd.f32 0.0, %v961
      %v963 = vpop.f32.mrf.mxu0
      %v964 = vadd.f32 0.0, %v963
      %965 = vmatmul.bf16.gmra.mxu0 %v929
      %v966 = vpop.f32.mrf.mxu0
      %v967 = vadd.f32 0.0, %v966
      %v968 = vpop.f32.mrf.mxu0
      %v969 = vadd.f32 0.0, %v968
      %970 = vmatmul.bf16.gmra.mxu0 %v930
      %v971 = vpop.f32.mrf.mxu0
      %v972 = vadd.f32 0.0, %v971
      %v973 = vpop.f32.mrf.mxu0
      %v974 = vadd.f32 0.0, %v973
      %975 = vmatmul.bf16.gmra.mxu0 %v931
      %v976 = vpop.f32.mrf.mxu0
      %v977 = vadd.f32 0.0, %v976
      %v978 = vpop.f32.mrf.mxu0
      %v979 = vadd.f32 0.0, %v978
      %980 = vmatmul.bf16.gmra.mxu0 %v932
      %v981 = vpop.f32.mrf.mxu0
      %v982 = vadd.f32 0.0, %v981
      %v983 = vpop.f32.mrf.mxu0
      %v984 = vadd.f32 0.0, %v983
      %985 = vmatmul.bf16.gmra.mxu0 %v933
      %v986 = vpop.f32.mrf.mxu0
      %v987 = vadd.f32 0.0, %v986
      %v988 = vpop.f32.mrf.mxu0
      %v989 = vadd.f32 0.0, %v988
      %990 = vdwg.mxu0
      %992 = vset.pattern.permute.xlu0 0
      %993 = vperm.xlu0 %992, %v952
      %v994 = vpop.permute.xlu0 %993
      %997 = vset.pattern.permute.xlu0 0
      %998 = vperm.xlu0 %997, %v954
      %v999 = vpop.permute.xlu0 %998
      %1002 = vset.pattern.permute.xlu0 0
      %1003 = vperm.xlu0 %1002, %v957
      %v1004 = vpop.permute.xlu0 %1003
      %1007 = vset.pattern.permute.xlu0 0
      %1008 = vperm.xlu0 %1007, %v959
      %v1009 = vpop.permute.xlu0 %1008
      %1012 = vset.pattern.permute.xlu0 0
      %1013 = vperm.xlu0 %1012, %v962
      %v1014 = vpop.permute.xlu0 %1013
      %1017 = vset.pattern.permute.xlu0 0
      %1018 = vperm.xlu0 %1017, %v964
      %v1019 = vpop.permute.xlu0 %1018
      %1022 = vset.pattern.permute.xlu0 0
      %1023 = vperm.xlu0 %1022, %v967
      %v1024 = vpop.permute.xlu0 %1023
      %1027 = vset.pattern.permute.xlu0 0
      %1028 = vperm.xlu0 %1027, %v969
      %v1029 = vpop.permute.xlu0 %1028
      %1032 = vset.pattern.permute.xlu0 0
      %1033 = vperm.xlu0 %1032, %v972
      %v1034 = vpop.permute.xlu0 %1033
      %1037 = vset.pattern.permute.xlu0 0
      %1038 = vperm.xlu0 %1037, %v974
      %v1039 = vpop.permute.xlu0 %1038
      %1042 = vset.pattern.permute.xlu0 0
      %1043 = vperm.xlu0 %1042, %v977
      %v1044 = vpop.permute.xlu0 %1043
      %1047 = vset.pattern.permute.xlu0 0
      %1048 = vperm.xlu0 %1047, %v979
      %v1049 = vpop.permute.xlu0 %1048
      %1052 = vset.pattern.permute.xlu0 0
      %1053 = vperm.xlu0 %1052, %v982
      %v1054 = vpop.permute.xlu0 %1053
      %1057 = vset.pattern.permute.xlu0 0
      %1058 = vperm.xlu0 %1057, %v984
      %v1059 = vpop.permute.xlu0 %1058
      %1062 = vset.pattern.permute.xlu0 0
      %1063 = vperm.xlu0 %1062, %v987
      %v1064 = vpop.permute.xlu0 %1063
      %1067 = vset.pattern.permute.xlu0 0
      %1068 = vperm.xlu0 %1067, %v989
      %v1069 = vpop.permute.xlu0 %1068
      %v1087 = vunpack.c.l.b16 %v466
      %v1088 = vunpack.c.l.b16 %v467
      %v1089 = vunpack.c.l.b16 %v468
      %v1090 = vunpack.c.l.b16 %v469
      %v1091 = vunpack.c.l.b16 %v470
      %v1092 = vunpack.c.l.b16 %v471
      %v1093 = vunpack.c.l.b16 %v472
      %v1094 = vunpack.c.l.b16 %v473
      %v1095 = vunpack.c.l.b16 %v474
      %v1096 = vunpack.c.l.b16 %v475
      %v1097 = vunpack.c.l.b16 %v476
      %v1098 = vunpack.c.l.b16 %v477
      %v1099 = vunpack.c.l.b16 %v478
      %v1100 = vunpack.c.l.b16 %v479
      %v1101 = vunpack.c.l.b16 %v480
      %v1102 = vunpack.c.l.b16 %v481
      %v1103 = vpack.c.b16 %v1088, %v1087
      %v1104 = vpack.c.b16 %v1090, %v1089
      %v1105 = vpack.c.b16 %v1092, %v1091
      %v1106 = vpack.c.b16 %v1094, %v1093
      %v1107 = vpack.c.b16 %v1096, %v1095
      %v1108 = vpack.c.b16 %v1098, %v1097
      %v1109 = vpack.c.b16 %v1100, %v1099
      %v1110 = vpack.c.b16 %v1102, %v1101
      %1119 = vmatpush.bf16.msra.mxu0 %v885
      %1120 = vmatpush.bf16.msra.mxu0 %v884
      %1121 = vmatpush.bf16.msra.mxu0 %v883
      %1122 = vmatpush.bf16.msra.mxu0 %v882
      %1123 = vmatpush.bf16.msra.mxu0 %v881
      %1124 = vmatpush.bf16.msra.mxu0 %v880
      %1125 = vmatpush.bf16.msra.mxu0 %v879
      %1126 = vmatpush.bf16.msra.mxu0 %v878
      %1127 = vmatmul.bf16.gmra.mxu0 %v1103
      %v1128 = vpop.f32.mrf.mxu0
      %v1129 = vadd.f32 %v994, %v1128
      %v1130 = vpop.f32.mrf.mxu0
      %v1131 = vadd.f32 %v999, %v1130
      %1132 = vmatmul.bf16.gmra.mxu0 %v1104
      %v1133 = vpop.f32.mrf.mxu0
      %v1134 = vadd.f32 %v1004, %v1133
      %v1135 = vpop.f32.mrf.mxu0
      %v1136 = vadd.f32 %v1009, %v1135
      %1137 = vmatmul.bf16.gmra.mxu0 %v1105
      %v1138 = vpop.f32.mrf.mxu0
      %v1139 = vadd.f32 %v1014, %v1138
      %v1140 = vpop.f32.mrf.mxu0
      %v1141 = vadd.f32 %v1019, %v1140
      %1142 = vmatmul.bf16.gmra.mxu0 %v1106
      %v1143 = vpop.f32.mrf.mxu0
      %v1144 = vadd.f32 %v1024, %v1143
      %v1145 = vpop.f32.mrf.mxu0
      %v1146 = vadd.f32 %v1029, %v1145
      %1147 = vmatmul.bf16.gmra.mxu0 %v1107
      %v1148 = vpop.f32.mrf.mxu0
      %v1149 = vadd.f32 %v1034, %v1148
      %v1150 = vpop.f32.mrf.mxu0
      %v1151 = vadd.f32 %v1039, %v1150
      %1152 = vmatmul.bf16.gmra.mxu0 %v1108
      %v1153 = vpop.f32.mrf.mxu0
      %v1154 = vadd.f32 %v1044, %v1153
      %v1155 = vpop.f32.mrf.mxu0
      %v1156 = vadd.f32 %v1049, %v1155
      %1157 = vmatmul.bf16.gmra.mxu0 %v1109
      %v1158 = vpop.f32.mrf.mxu0
      %v1159 = vadd.f32 %v1054, %v1158
      %v1160 = vpop.f32.mrf.mxu0
      %v1161 = vadd.f32 %v1059, %v1160
      %1162 = vmatmul.bf16.gmra.mxu0 %v1110
      %v1163 = vpop.f32.mrf.mxu0
      %v1164 = vadd.f32 %v1064, %v1163
      %v1165 = vpop.f32.mrf.mxu0
      %v1166 = vadd.f32 %v1069, %v1165
      %1167 = vdwg.mxu0
      %1169 = vset.pattern.permute.xlu0 0
      %1170 = vperm.xlu0 %1169, %v498
      %v1171 = vpop.permute.xlu0 %1170
      %1174 = vset.pattern.permute.xlu0 0
      %1175 = vperm.xlu0 %1174, %v499
      %v1176 = vpop.permute.xlu0 %1175
      %1179 = vset.pattern.permute.xlu0 0
      %1180 = vperm.xlu0 %1179, %v500
      %v1181 = vpop.permute.xlu0 %1180
      %1184 = vset.pattern.permute.xlu0 0
      %1185 = vperm.xlu0 %1184, %v501
      %v1186 = vpop.permute.xlu0 %1185
      %1189 = vset.pattern.permute.xlu0 0
      %1190 = vperm.xlu0 %1189, %v502
      %v1191 = vpop.permute.xlu0 %1190
      %1194 = vset.pattern.permute.xlu0 0
      %1195 = vperm.xlu0 %1194, %v503
      %v1196 = vpop.permute.xlu0 %1195
      %1199 = vset.pattern.permute.xlu0 0
      %1200 = vperm.xlu0 %1199, %v504
      %v1201 = vpop.permute.xlu0 %1200
      %1204 = vset.pattern.permute.xlu0 0
      %1205 = vperm.xlu0 %1204, %v505
      %v1206 = vpop.permute.xlu0 %1205
      %1209 = vset.pattern.permute.xlu0 0
      %1210 = vperm.xlu0 %1209, %v506
      %v1211 = vpop.permute.xlu0 %1210
      %1214 = vset.pattern.permute.xlu0 0
      %1215 = vperm.xlu0 %1214, %v507
      %v1216 = vpop.permute.xlu0 %1215
      %1219 = vset.pattern.permute.xlu0 0
      %1220 = vperm.xlu0 %1219, %v508
      %v1221 = vpop.permute.xlu0 %1220
      %1224 = vset.pattern.permute.xlu0 0
      %1225 = vperm.xlu0 %1224, %v509
      %v1226 = vpop.permute.xlu0 %1225
      %1229 = vset.pattern.permute.xlu0 0
      %1230 = vperm.xlu0 %1229, %v510
      %v1231 = vpop.permute.xlu0 %1230
      %1234 = vset.pattern.permute.xlu0 0
      %1235 = vperm.xlu0 %1234, %v511
      %v1236 = vpop.permute.xlu0 %1235
      %1239 = vset.pattern.permute.xlu0 0
      %1240 = vperm.xlu0 %1239, %v512
      %v1241 = vpop.permute.xlu0 %1240
      %1244 = vset.pattern.permute.xlu0 0
      %1245 = vperm.xlu0 %1244, %v513
      %v1246 = vpop.permute.xlu0 %1245
      %v1248 = vadd.f32 %v1129, %v1171
      %v1249 = vadd.f32 %v1131, %v1176
      %v1250 = vadd.f32 %v1134, %v1181
      %v1251 = vadd.f32 %v1136, %v1186
      %v1252 = vadd.f32 %v1139, %v1191
      %v1253 = vadd.f32 %v1141, %v1196
      %v1254 = vadd.f32 %v1144, %v1201
      %v1255 = vadd.f32 %v1146, %v1206
      %v1256 = vadd.f32 %v1149, %v1211
      %v1257 = vadd.f32 %v1151, %v1216
      %v1258 = vadd.f32 %v1154, %v1221
      %v1259 = vadd.f32 %v1156, %v1226
      %v1260 = vadd.f32 %v1159, %v1231
      %v1261 = vadd.f32 %v1161, %v1236
      %v1262 = vadd.f32 %v1164, %v1241
      %v1263 = vadd.f32 %v1166, %v1246
      %v1264 = vmax.f32 %v1248, 0.0
      %v1265 = vmax.f32 %v1249, 0.0
      %v1266 = vmax.f32 %v1250, 0.0
      %v1267 = vmax.f32 %v1251, 0.0
      %v1268 = vmax.f32 %v1252, 0.0
      %v1269 = vmax.f32 %v1253, 0.0
      %v1270 = vmax.f32 %v1254, 0.0
      %v1271 = vmax.f32 %v1255, 0.0
      %v1272 = vmax.f32 %v1256, 0.0
      %v1273 = vmax.f32 %v1257, 0.0
      %v1274 = vmax.f32 %v1258, 0.0
      %v1275 = vmax.f32 %v1259, 0.0
      %v1276 = vmax.f32 %v1260, 0.0
      %v1277 = vmax.f32 %v1261, 0.0
      %v1278 = vmax.f32 %v1262, 0.0
      %v1279 = vmax.f32 %v1263, 0.0
      %v1280 = vpack.c.bf16 %v1265, %v1264
      %v1281 = vpack.c.bf16 %v1267, %v1266
      %v1282 = vpack.c.bf16 %v1269, %v1268
      %v1283 = vpack.c.bf16 %v1271, %v1270
      %v1284 = vpack.c.bf16 %v1273, %v1272
      %v1285 = vpack.c.bf16 %v1275, %v1274
      %v1286 = vpack.c.bf16 %v1277, %v1276
      %v1287 = vpack.c.bf16 %v1279, %v1278
      %v1288 = vld [vmem:[%s8] sm:$0xf]
      %v1289 = vld [vmem:[%s8 + $0x4] sm:$0x1]
      %v1290 = vld [vmem:[%s9] sm:$0xff]
      %v1291 = vld [vmem:[%s9 + $0x8] sm:$0x1]
      %1293 = vset.pattern.permute.xlu0 0
      %1294 = vperm.xlu0 %1293, %v1290
      %v1295 = vpop.permute.xlu0 %1294
      %1298 = vset.pattern.permute.xlu0 0
      %1299 = vperm.xlu0 %1298, %v1291
      %v1300 = vpop.permute.xlu0 %1299
      %v1304 = vunpack.c.l.b16 %v1288
      %v1305 = vunpack.c.l.b16 %v1289
      %v1306 = vpack.c.b16 %v1305, %v1304
      %1308 = vmatpush.bf16.msra.mxu0 %v1287
      %1309 = vmatpush.bf16.msra.mxu0 %v1286
      %1310 = vmatpush.bf16.msra.mxu0 %v1285
      %1311 = vmatpush.bf16.msra.mxu0 %v1284
      %1312 = vmatpush.bf16.msra.mxu0 %v1283
      %1313 = vmatpush.bf16.msra.mxu0 %v1282
      %1314 = vmatpush.bf16.msra.mxu0 %v1281
      %1315 = vmatpush.bf16.msra.mxu0 %v1280
      %1316 = vmatmul.bf16.gmra.mxu0 %v1306
      %v1317 = vpop.f32.mrf.mxu0
      %v1318 = vadd.f32 %v1295, %v1317
      %v1319 = vpop.f32.mrf.mxu0
      %v1320 = vadd.f32 %v1300, %v1319
      %1321 = vdwg.mxu0
      %vm1322 = vcmp.eq.s32.totalorder %v433, 0
      %v1323 = vsel %vm1322, 1, 0
      %v1324 = vcvt.s32.f32 %v1323
      %v1326 = vperm.slane %v1324, 0
      %v1328 = vmul.f32 %v1318, %v1326
      %v1329 = vmul.f32 %v1320, %v1326
      %1330 = vadd.xlane.f32.xlu0 %v1328
      %v1331 = vpop.xlane.xlu0 %1330
      %vm1332 = vcmask 1040384
      %v1333 = vsel %vm1332, %v1329, 0.0
      %1334 = vadd.xlane.f32.xlu0 %v1333
      %v1335 = vpop.xlane.xlu0 %1334
      %vm1336 = vcmask 7168
      %1337 = vst.msk [vmem:[%s430] sm:$0xff] %vm1336, %v1331
      %vm1338 = vcmask 0
      %1339 = vst.msk [vmem:[%s430 + $0x8] sm:$0x1] %vm1338, %v1335
      %v1340 = vmul.f32 %v1318, %v1318
      %v1341 = vsel %vm579, %v1340, 0.0
      %v1342 = vrot.slane %v1341, 4
      %v1343 = vadd.f32 %v1341, %v1342
      %v1344 = vrot.slane %v1343, 2
      %v1345 = vadd.f32 %v1343, %v1344
      %v1346 = vrot.slane %v1345, 1
      %v1347 = vadd.f32 %v1345, %v1346
      %v1348 = vmax.f32 %v1347, 1e-12
      %v1349 = vrsqrt.pop %v1348
      %v1350 = vmul.f32 %v1349, %v1348
      %v1351 = vmul.f32 %v1350, %v1349
      %v1352 = vmul.f32 0.5, %v1351
      %v1353 = vsub.f32 1.5, %v1352
      %v1354 = vmul.f32 %v1349, %v1353
      %vm1355 = vweird.f32 %v1348
      %vm1356 = vweird.f32 %v1349
      %vm1357 = vmor %vm1355, %vm1356
      %v1358 = vsel %vm1357, %v1349, %v1354
      %v1359 = vmul.f32 %v1318, %v1358
      %v1361 = vrot.slane %v1318, 3
      %v1363 = vmul.f32 %v1359, %v1361
      %v1364 = vsel %vm579, %v1363, 0.0
      %v1365 = vrot.slane %v1364, 4
      %v1366 = vadd.f32 %v1364, %v1365
      %v1367 = vrot.slane %v1366, 2
      %v1368 = vadd.f32 %v1366, %v1367
      %v1369 = vrot.slane %v1368, 1
      %v1370 = vadd.f32 %v1368, %v1369
      %v1371 = vmul.f32 %v1370, %v1359
      %v1373 = vrot.slane %v1371, 5
      %v1375 = vsub.f32 %v1318, %v1373
      %v1376 = vmul.f32 %v1375, %v1375
      %v1378 = vrot.slane %v1376, 3
      %v1380 = vsel %vm579, %v1378, 0.0
      %v1381 = vrot.slane %v1380, 4
      %v1382 = vadd.f32 %v1380, %v1381
      %v1383 = vrot.slane %v1382, 2
      %v1384 = vadd.f32 %v1382, %v1383
      %v1385 = vrot.slane %v1384, 1
      %v1386 = vadd.f32 %v1384, %v1385
      %v1387 = vmax.f32 %v1386, 1e-12
      %v1388 = vrsqrt.pop %v1387
      %v1389 = vmul.f32 %v1388, %v1387
      %v1390 = vmul.f32 %v1389, %v1388
      %v1391 = vmul.f32 0.5, %v1390
      %v1392 = vsub.f32 1.5, %v1391
      %v1393 = vmul.f32 %v1388, %v1392
      %vm1394 = vweird.f32 %v1387
      %vm1395 = vweird.f32 %v1388
      %vm1396 = vmor %vm1394, %vm1395
      %v1397 = vsel %vm1396, %v1388, %v1393
      %v1398 = vmul.f32 %v1375, %v1397
      %1399 = vst [vmem:[%s425] sm:$0x7] %v1359
      %1400 = vst [vmem:[%s425] sm:$0x38] %v1398
      %v1402 = vrot.slane %v1398, 4
      %v1404 = vmul.f32 %v1359, %v1402
      %v1405 = vrot.slane %v1398, 2
      %v1407 = vmul.f32 %v1359, %v1405
      %v1409 = vrot.slane %v1407, 1
      %v1411 = vsub.f32 %v1404, %v1409
      %1412 = vst [vmem:[%s425 + $0x5] sm:$0x2] %v1411
      %v1413 = vrot.slane %v1398, 1
      %v1415 = vmul.f32 %v1359, %v1413
      %v1416 = vrot.slane %v1398, 5
      %v1418 = vmul.f32 %v1359, %v1416
      %v1420 = vrot.slane %v1418, 6
      %v1422 = vsub.f32 %v1415, %v1420
      %1423 = vst [vmem:[%s425 + $0x5] sm:$0x4] %v1422
      %1424 = vst [vmem:[%s425 + $0x8] sm:$0x1] %v1411
      %s1425 = scalar_lea.vmem %s420, 64
      %v1426 = vld [vmem:[%s1425] sm:$0xff]
      %v1427 = vld [vmem:[%s1425 + $0x8] sm:$0xff]
      %v1428 = vld [vmem:[%s1425 + $0x10] sm:$0xff]
      %v1429 = vld [vmem:[%s1425 + $0x18] sm:$0xff]
      %v1430 = vld [vmem:[%s1425 + $0x20] sm:$0xff]
      %v1431 = vld [vmem:[%s1425 + $0x28] sm:$0xff]
      %v1432 = vld [vmem:[%s1425 + $0x30] sm:$0xff]
      %v1433 = vld [vmem:[%s1425 + $0x38] sm:$0xff]
      %1435 = vset.pattern.permute.xlu0 3
      %1436 = vperm.xlu0 %1435, %v1426
      %v1437 = vpop.permute.xlu0 %1436
      %1440 = vset.pattern.permute.xlu0 3
      %1441 = vperm.xlu0 %1440, %v1427
      %v1442 = vpop.permute.xlu0 %1441
      %1445 = vset.pattern.permute.xlu0 3
      %1446 = vperm.xlu0 %1445, %v1428
      %v1447 = vpop.permute.xlu0 %1446
      %1450 = vset.pattern.permute.xlu0 3
      %1451 = vperm.xlu0 %1450, %v1429
      %v1452 = vpop.permute.xlu0 %1451
      %1455 = vset.pattern.permute.xlu0 3
      %1456 = vperm.xlu0 %1455, %v1430
      %v1457 = vpop.permute.xlu0 %1456
      %1460 = vset.pattern.permute.xlu0 3
      %1461 = vperm.xlu0 %1460, %v1431
      %v1462 = vpop.permute.xlu0 %1461
      %1465 = vset.pattern.permute.xlu0 3
      %1466 = vperm.xlu0 %1465, %v1432
      %v1467 = vpop.permute.xlu0 %1466
      %1470 = vset.pattern.permute.xlu0 3
      %1471 = vperm.xlu0 %1470, %v1433
      %v1472 = vpop.permute.xlu0 %1471
      %v1474 = vsel %vm562, %v1426, 0
      %v1476 = vsel %vm562, %v1427, 0
      %v1478 = vsel %vm562, %v1428, 0
      %v1480 = vsel %vm562, %v1429, 0
      %v1482 = vsel %vm562, %v1430, 0
      %v1484 = vsel %vm562, %v1431, 0
      %v1486 = vsel %vm562, %v1432, 0
      %v1488 = vsel %vm562, %v1433, 0
      %1490 = vmatpush.msra.mxu0 0.0
      %1491 = vmatpush.msra.mxu0 0.0
      %1492 = vmatpush.msra.mxu0 0.0
      %1493 = vmatpush.msra.mxu0 0.0
      %1494 = vmatpush.msra.mxu0 0.0
      %1495 = vmatpush.msra.mxu0 0.0
      %1496 = vmatpush.msra.mxu0 0.0
      %1497 = vmatpush.msra.mxu0 0.0
      %1498 = vmatpush.msra.mxu0 0.0
      %1499 = vmatpush.msra.mxu0 0.0
      %1500 = vmatpush.msra.mxu0 0.0
      %1501 = vmatpush.msra.mxu0 0.0
      %1502 = vmatpush.msra.mxu0 0.0
      %1503 = vmatpush.msra.mxu0 0.0
      %1504 = vmatpush.msra.mxu0 0.0
      %1505 = vmatpush.msra.mxu0 %v581
      %1506 = vmatmul.f32.gmra.mxu0 %v1474
      %v1507 = vpop.f32.mrf.mxu0
      %v1508 = vadd.f32 %v1437, %v1507
      %1509 = vmatmul.f32.gmra.mxu0 %v1476
      %v1510 = vpop.f32.mrf.mxu0
      %v1511 = vadd.f32 %v1442, %v1510
      %1512 = vmatmul.f32.gmra.mxu0 %v1478
      %v1513 = vpop.f32.mrf.mxu0
      %v1514 = vadd.f32 %v1447, %v1513
      %1515 = vmatmul.f32.gmra.mxu0 %v1480
      %v1516 = vpop.f32.mrf.mxu0
      %v1517 = vadd.f32 %v1452, %v1516
      %1518 = vmatmul.f32.gmra.mxu0 %v1482
      %v1519 = vpop.f32.mrf.mxu0
      %v1520 = vadd.f32 %v1457, %v1519
      %1521 = vmatmul.f32.gmra.mxu0 %v1484
      %v1522 = vpop.f32.mrf.mxu0
      %v1523 = vadd.f32 %v1462, %v1522
      %1524 = vmatmul.f32.gmra.mxu0 %v1486
      %v1525 = vpop.f32.mrf.mxu0
      %v1526 = vadd.f32 %v1467, %v1525
      %1527 = vmatmul.f32.gmra.mxu0 %v1488
      %v1528 = vpop.f32.mrf.mxu0
      %v1529 = vadd.f32 %v1472, %v1528
      %1530 = vdwg.mxu0
      %v1531 = vmax.f32 %v1508, 0.0
      %v1532 = vmax.f32 %v1511, 0.0
      %v1533 = vmax.f32 %v1514, 0.0
      %v1534 = vmax.f32 %v1517, 0.0
      %v1535 = vmax.f32 %v1520, 0.0
      %v1536 = vmax.f32 %v1523, 0.0
      %v1537 = vmax.f32 %v1526, 0.0
      %v1538 = vmax.f32 %v1529, 0.0
      %v1539 = vpack.c.bf16 %v1532, %v1531
      %v1540 = vpack.c.bf16 %v1534, %v1533
      %v1541 = vpack.c.bf16 %v1536, %v1535
      %v1542 = vpack.c.bf16 %v1538, %v1537
      %1543 = vmatpush.bf16.msra.mxu0 0
      %1544 = vmatpush.bf16.msra.mxu0 0
      %1545 = vmatpush.bf16.msra.mxu0 0
      %1546 = vmatpush.bf16.msra.mxu0 0
      %1547 = vmatpush.bf16.msra.mxu0 %v1542
      %1548 = vmatpush.bf16.msra.mxu0 %v1541
      %1549 = vmatpush.bf16.msra.mxu0 %v1540
      %1550 = vmatpush.bf16.msra.mxu0 %v1539
      %1551 = vmatmul.bf16.gmra.mxu0 %v758
      %v1552 = vpop.f32.mrf.mxu0
      %v1553 = vadd.f32 %v639, %v1552
      %v1554 = vpop.f32.mrf.mxu0
      %v1555 = vadd.f32 %v644, %v1554
      %1556 = vmatmul.bf16.gmra.mxu0 %v761
      %v1557 = vpop.f32.mrf.mxu0
      %v1558 = vadd.f32 %v649, %v1557
      %v1559 = vpop.f32.mrf.mxu0
      %v1560 = vadd.f32 %v654, %v1559
      %1561 = vmatmul.bf16.gmra.mxu0 %v764
      %v1562 = vpop.f32.mrf.mxu0
      %v1563 = vadd.f32 %v659, %v1562
      %v1564 = vpop.f32.mrf.mxu0
      %v1565 = vadd.f32 %v664, %v1564
      %1566 = vmatmul.bf16.gmra.mxu0 %v767
      %v1567 = vpop.f32.mrf.mxu0
      %v1568 = vadd.f32 %v669, %v1567
      %v1569 = vpop.f32.mrf.mxu0
      %v1570 = vadd.f32 %v674, %v1569
      %1571 = vmatmul.bf16.gmra.mxu0 %v770
      %v1572 = vpop.f32.mrf.mxu0
      %v1573 = vadd.f32 %v679, %v1572
      %v1574 = vpop.f32.mrf.mxu0
      %v1575 = vadd.f32 %v684, %v1574
      %1576 = vmatmul.bf16.gmra.mxu0 %v773
      %v1577 = vpop.f32.mrf.mxu0
      %v1578 = vadd.f32 %v689, %v1577
      %v1579 = vpop.f32.mrf.mxu0
      %v1580 = vadd.f32 %v694, %v1579
      %1581 = vmatmul.bf16.gmra.mxu0 %v776
      %v1582 = vpop.f32.mrf.mxu0
      %v1583 = vadd.f32 %v699, %v1582
      %v1584 = vpop.f32.mrf.mxu0
      %v1585 = vadd.f32 %v704, %v1584
      %1586 = vmatmul.bf16.gmra.mxu0 %v779
      %v1587 = vpop.f32.mrf.mxu0
      %v1588 = vadd.f32 %v709, %v1587
      %v1589 = vpop.f32.mrf.mxu0
      %v1590 = vadd.f32 %v714, %v1589
      %1591 = vdwg.mxu0
      %v1592 = vmax.f32 %v1553, 0.0
      %v1593 = vmax.f32 %v1555, 0.0
      %v1594 = vmax.f32 %v1558, 0.0
      %v1595 = vmax.f32 %v1560, 0.0
      %v1596 = vmax.f32 %v1563, 0.0
      %v1597 = vmax.f32 %v1565, 0.0
      %v1598 = vmax.f32 %v1568, 0.0
      %v1599 = vmax.f32 %v1570, 0.0
      %v1600 = vmax.f32 %v1573, 0.0
      %v1601 = vmax.f32 %v1575, 0.0
      %v1602 = vmax.f32 %v1578, 0.0
      %v1603 = vmax.f32 %v1580, 0.0
      %v1604 = vmax.f32 %v1583, 0.0
      %v1605 = vmax.f32 %v1585, 0.0
      %v1606 = vmax.f32 %v1588, 0.0
      %v1607 = vmax.f32 %v1590, 0.0
      %1608 = vmax.xlane.f32.xlu0 %v1592
      %v1609 = vpop.xlane.xlu0 %1608
      %1610 = vmax.xlane.f32.xlu0 %v1593
      %v1611 = vpop.xlane.xlu0 %1610
      %1612 = vmax.xlane.f32.xlu0 %v1594
      %v1613 = vpop.xlane.xlu0 %1612
      %1614 = vmax.xlane.f32.xlu0 %v1595
      %v1615 = vpop.xlane.xlu0 %1614
      %1616 = vmax.xlane.f32.xlu0 %v1596
      %v1617 = vpop.xlane.xlu0 %1616
      %1618 = vmax.xlane.f32.xlu0 %v1597
      %v1619 = vpop.xlane.xlu0 %1618
      %1620 = vmax.xlane.f32.xlu0 %v1598
      %v1621 = vpop.xlane.xlu0 %1620
      %1622 = vmax.xlane.f32.xlu0 %v1599
      %v1623 = vpop.xlane.xlu0 %1622
      %1624 = vmax.xlane.f32.xlu0 %v1600
      %v1625 = vpop.xlane.xlu0 %1624
      %1626 = vmax.xlane.f32.xlu0 %v1601
      %v1627 = vpop.xlane.xlu0 %1626
      %1628 = vmax.xlane.f32.xlu0 %v1602
      %v1629 = vpop.xlane.xlu0 %1628
      %1630 = vmax.xlane.f32.xlu0 %v1603
      %v1631 = vpop.xlane.xlu0 %1630
      %1632 = vmax.xlane.f32.xlu0 %v1604
      %v1633 = vpop.xlane.xlu0 %1632
      %1634 = vmax.xlane.f32.xlu0 %v1605
      %v1635 = vpop.xlane.xlu0 %1634
      %1636 = vmax.xlane.f32.xlu0 %v1606
      %v1637 = vpop.xlane.xlu0 %1636
      %1638 = vmax.xlane.f32.xlu0 %v1607
      %v1639 = vpop.xlane.xlu0 %1638
      %v1640 = vpack.c.bf16 %v1593, %v1592
      %v1641 = vpack.c.bf16 %v1595, %v1594
      %v1642 = vpack.c.bf16 %v1597, %v1596
      %v1643 = vpack.c.bf16 %v1599, %v1598
      %v1644 = vpack.c.bf16 %v1601, %v1600
      %v1645 = vpack.c.bf16 %v1603, %v1602
      %v1646 = vpack.c.bf16 %v1605, %v1604
      %v1647 = vpack.c.bf16 %v1607, %v1606
      %v1648 = vpack.c.bf16 %v1611, %v1609
      %v1649 = vpack.c.bf16 %v1615, %v1613
      %v1650 = vpack.c.bf16 %v1619, %v1617
      %v1651 = vpack.c.bf16 %v1623, %v1621
      %v1652 = vpack.c.bf16 %v1627, %v1625
      %v1653 = vpack.c.bf16 %v1631, %v1629
      %v1654 = vpack.c.bf16 %v1635, %v1633
      %v1655 = vpack.c.bf16 %v1639, %v1637
      %1656 = vmatpush.bf16.msra.mxu0 %v1655
      %1657 = vmatpush.bf16.msra.mxu0 %v1654
      %1658 = vmatpush.bf16.msra.mxu0 %v1653
      %1659 = vmatpush.bf16.msra.mxu0 %v1652
      %1660 = vmatpush.bf16.msra.mxu0 %v1651
      %1661 = vmatpush.bf16.msra.mxu0 %v1650
      %1662 = vmatpush.bf16.msra.mxu0 %v1649
      %1663 = vmatpush.bf16.msra.mxu0 %v1648
      %1664 = vmatmul.bf16.gmra.mxu0 %v926
      %v1665 = vpop.f32.mrf.mxu0
      %v1666 = vadd.f32 0.0, %v1665
      %v1667 = vpop.f32.mrf.mxu0
      %v1668 = vadd.f32 0.0, %v1667
      %1669 = vmatmul.bf16.gmra.mxu0 %v927
      %v1670 = vpop.f32.mrf.mxu0
      %v1671 = vadd.f32 0.0, %v1670
      %v1672 = vpop.f32.mrf.mxu0
      %v1673 = vadd.f32 0.0, %v1672
      %1674 = vmatmul.bf16.gmra.mxu0 %v928
      %v1675 = vpop.f32.mrf.mxu0
      %v1676 = vadd.f32 0.0, %v1675
      %v1677 = vpop.f32.mrf.mxu0
      %v1678 = vadd.f32 0.0, %v1677
      %1679 = vmatmul.bf16.gmra.mxu0 %v929
      %v1680 = vpop.f32.mrf.mxu0
      %v1681 = vadd.f32 0.0, %v1680
      %v1682 = vpop.f32.mrf.mxu0
      %v1683 = vadd.f32 0.0, %v1682
      %1684 = vmatmul.bf16.gmra.mxu0 %v930
      %v1685 = vpop.f32.mrf.mxu0
      %v1686 = vadd.f32 0.0, %v1685
      %v1687 = vpop.f32.mrf.mxu0
      %v1688 = vadd.f32 0.0, %v1687
      %1689 = vmatmul.bf16.gmra.mxu0 %v931
      %v1690 = vpop.f32.mrf.mxu0
      %v1691 = vadd.f32 0.0, %v1690
      %v1692 = vpop.f32.mrf.mxu0
      %v1693 = vadd.f32 0.0, %v1692
      %1694 = vmatmul.bf16.gmra.mxu0 %v932
      %v1695 = vpop.f32.mrf.mxu0
      %v1696 = vadd.f32 0.0, %v1695
      %v1697 = vpop.f32.mrf.mxu0
      %v1698 = vadd.f32 0.0, %v1697
      %1699 = vmatmul.bf16.gmra.mxu0 %v933
      %v1700 = vpop.f32.mrf.mxu0
      %v1701 = vadd.f32 0.0, %v1700
      %v1702 = vpop.f32.mrf.mxu0
      %v1703 = vadd.f32 0.0, %v1702
      %1704 = vdwg.mxu0
      %1706 = vset.pattern.permute.xlu0 0
      %1707 = vperm.xlu0 %1706, %v1666
      %v1708 = vpop.permute.xlu0 %1707
      %1711 = vset.pattern.permute.xlu0 0
      %1712 = vperm.xlu0 %1711, %v1668
      %v1713 = vpop.permute.xlu0 %1712
      %1716 = vset.pattern.permute.xlu0 0
      %1717 = vperm.xlu0 %1716, %v1671
      %v1718 = vpop.permute.xlu0 %1717
      %1721 = vset.pattern.permute.xlu0 0
      %1722 = vperm.xlu0 %1721, %v1673
      %v1723 = vpop.permute.xlu0 %1722
      %1726 = vset.pattern.permute.xlu0 0
      %1727 = vperm.xlu0 %1726, %v1676
      %v1728 = vpop.permute.xlu0 %1727
      %1731 = vset.pattern.permute.xlu0 0
      %1732 = vperm.xlu0 %1731, %v1678
      %v1733 = vpop.permute.xlu0 %1732
      %1736 = vset.pattern.permute.xlu0 0
      %1737 = vperm.xlu0 %1736, %v1681
      %v1738 = vpop.permute.xlu0 %1737
      %1741 = vset.pattern.permute.xlu0 0
      %1742 = vperm.xlu0 %1741, %v1683
      %v1743 = vpop.permute.xlu0 %1742
      %1746 = vset.pattern.permute.xlu0 0
      %1747 = vperm.xlu0 %1746, %v1686
      %v1748 = vpop.permute.xlu0 %1747
      %1751 = vset.pattern.permute.xlu0 0
      %1752 = vperm.xlu0 %1751, %v1688
      %v1753 = vpop.permute.xlu0 %1752
      %1756 = vset.pattern.permute.xlu0 0
      %1757 = vperm.xlu0 %1756, %v1691
      %v1758 = vpop.permute.xlu0 %1757
      %1761 = vset.pattern.permute.xlu0 0
      %1762 = vperm.xlu0 %1761, %v1693
      %v1763 = vpop.permute.xlu0 %1762
      %1766 = vset.pattern.permute.xlu0 0
      %1767 = vperm.xlu0 %1766, %v1696
      %v1768 = vpop.permute.xlu0 %1767
      %1771 = vset.pattern.permute.xlu0 0
      %1772 = vperm.xlu0 %1771, %v1698
      %v1773 = vpop.permute.xlu0 %1772
      %1776 = vset.pattern.permute.xlu0 0
      %1777 = vperm.xlu0 %1776, %v1701
      %v1778 = vpop.permute.xlu0 %1777
      %1781 = vset.pattern.permute.xlu0 0
      %1782 = vperm.xlu0 %1781, %v1703
      %v1783 = vpop.permute.xlu0 %1782
      %1785 = vmatpush.bf16.msra.mxu0 %v1647
      %1786 = vmatpush.bf16.msra.mxu0 %v1646
      %1787 = vmatpush.bf16.msra.mxu0 %v1645
      %1788 = vmatpush.bf16.msra.mxu0 %v1644
      %1789 = vmatpush.bf16.msra.mxu0 %v1643
      %1790 = vmatpush.bf16.msra.mxu0 %v1642
      %1791 = vmatpush.bf16.msra.mxu0 %v1641
      %1792 = vmatpush.bf16.msra.mxu0 %v1640
      %1793 = vmatmul.bf16.gmra.mxu0 %v1103
      %v1794 = vpop.f32.mrf.mxu0
      %v1795 = vadd.f32 %v1708, %v1794
      %v1796 = vpop.f32.mrf.mxu0
      %v1797 = vadd.f32 %v1713, %v1796
      %1798 = vmatmul.bf16.gmra.mxu0 %v1104
      %v1799 = vpop.f32.mrf.mxu0
      %v1800 = vadd.f32 %v1718, %v1799
      %v1801 = vpop.f32.mrf.mxu0
      %v1802 = vadd.f32 %v1723, %v1801
      %1803 = vmatmul.bf16.gmra.mxu0 %v1105
      %v1804 = vpop.f32.mrf.mxu0
      %v1805 = vadd.f32 %v1728, %v1804
      %v1806 = vpop.f32.mrf.mxu0
      %v1807 = vadd.f32 %v1733, %v1806
      %1808 = vmatmul.bf16.gmra.mxu0 %v1106
      %v1809 = vpop.f32.mrf.mxu0
      %v1810 = vadd.f32 %v1738, %v1809
      %v1811 = vpop.f32.mrf.mxu0
      %v1812 = vadd.f32 %v1743, %v1811
      %1813 = vmatmul.bf16.gmra.mxu0 %v1107
      %v1814 = vpop.f32.mrf.mxu0
      %v1815 = vadd.f32 %v1748, %v1814
      %v1816 = vpop.f32.mrf.mxu0
      %v1817 = vadd.f32 %v1753, %v1816
      %1818 = vmatmul.bf16.gmra.mxu0 %v1108
      %v1819 = vpop.f32.mrf.mxu0
      %v1820 = vadd.f32 %v1758, %v1819
      %v1821 = vpop.f32.mrf.mxu0
      %v1822 = vadd.f32 %v1763, %v1821
      %1823 = vmatmul.bf16.gmra.mxu0 %v1109
      %v1824 = vpop.f32.mrf.mxu0
      %v1825 = vadd.f32 %v1768, %v1824
      %v1826 = vpop.f32.mrf.mxu0
      %v1827 = vadd.f32 %v1773, %v1826
      %1828 = vmatmul.bf16.gmra.mxu0 %v1110
      %v1829 = vpop.f32.mrf.mxu0
      %v1830 = vadd.f32 %v1778, %v1829
      %v1831 = vpop.f32.mrf.mxu0
      %v1832 = vadd.f32 %v1783, %v1831
      %1833 = vdwg.mxu0
      %v1834 = vadd.f32 %v1795, %v1171
      %v1835 = vadd.f32 %v1797, %v1176
      %v1836 = vadd.f32 %v1800, %v1181
      %v1837 = vadd.f32 %v1802, %v1186
      %v1838 = vadd.f32 %v1805, %v1191
      %v1839 = vadd.f32 %v1807, %v1196
      %v1840 = vadd.f32 %v1810, %v1201
      %v1841 = vadd.f32 %v1812, %v1206
      %v1842 = vadd.f32 %v1815, %v1211
      %v1843 = vadd.f32 %v1817, %v1216
      %v1844 = vadd.f32 %v1820, %v1221
      %v1845 = vadd.f32 %v1822, %v1226
      %v1846 = vadd.f32 %v1825, %v1231
      %v1847 = vadd.f32 %v1827, %v1236
      %v1848 = vadd.f32 %v1830, %v1241
      %v1849 = vadd.f32 %v1832, %v1246
      %v1850 = vmax.f32 %v1834, 0.0
      %v1851 = vmax.f32 %v1835, 0.0
      %v1852 = vmax.f32 %v1836, 0.0
      %v1853 = vmax.f32 %v1837, 0.0
      %v1854 = vmax.f32 %v1838, 0.0
      %v1855 = vmax.f32 %v1839, 0.0
      %v1856 = vmax.f32 %v1840, 0.0
      %v1857 = vmax.f32 %v1841, 0.0
      %v1858 = vmax.f32 %v1842, 0.0
      %v1859 = vmax.f32 %v1843, 0.0
      %v1860 = vmax.f32 %v1844, 0.0
      %v1861 = vmax.f32 %v1845, 0.0
      %v1862 = vmax.f32 %v1846, 0.0
      %v1863 = vmax.f32 %v1847, 0.0
      %v1864 = vmax.f32 %v1848, 0.0
      %v1865 = vmax.f32 %v1849, 0.0
      %v1866 = vpack.c.bf16 %v1851, %v1850
      %v1867 = vpack.c.bf16 %v1853, %v1852
      %v1868 = vpack.c.bf16 %v1855, %v1854
      %v1869 = vpack.c.bf16 %v1857, %v1856
      %v1870 = vpack.c.bf16 %v1859, %v1858
      %v1871 = vpack.c.bf16 %v1861, %v1860
      %v1872 = vpack.c.bf16 %v1863, %v1862
      %v1873 = vpack.c.bf16 %v1865, %v1864
      %s1874 = scalar_lea.vmem %s8, 8
      %v1875 = vld [vmem:[%s1874] sm:$0xf]
      %v1876 = vld [vmem:[%s1874 + $0x4] sm:$0x1]
      %s1877 = scalar_lea.vmem %s9, 16
      %v1878 = vld [vmem:[%s1877] sm:$0xff]
      %v1879 = vld [vmem:[%s1877 + $0x8] sm:$0x1]
      %1881 = vset.pattern.permute.xlu0 0
      %1882 = vperm.xlu0 %1881, %v1878
      %v1883 = vpop.permute.xlu0 %1882
      %1886 = vset.pattern.permute.xlu0 0
      %1887 = vperm.xlu0 %1886, %v1879
      %v1888 = vpop.permute.xlu0 %1887
      %v1892 = vunpack.c.l.b16 %v1875
      %v1893 = vunpack.c.l.b16 %v1876
      %v1894 = vpack.c.b16 %v1893, %v1892
      %1896 = vmatpush.bf16.msra.mxu0 %v1873
      %1897 = vmatpush.bf16.msra.mxu0 %v1872
      %1898 = vmatpush.bf16.msra.mxu0 %v1871
      %1899 = vmatpush.bf16.msra.mxu0 %v1870
      %1900 = vmatpush.bf16.msra.mxu0 %v1869
      %1901 = vmatpush.bf16.msra.mxu0 %v1868
      %1902 = vmatpush.bf16.msra.mxu0 %v1867
      %1903 = vmatpush.bf16.msra.mxu0 %v1866
      %1904 = vmatmul.bf16.gmra.mxu0 %v1894
      %v1905 = vpop.f32.mrf.mxu0
      %v1906 = vadd.f32 %v1883, %v1905
      %v1907 = vpop.f32.mrf.mxu0
      %v1908 = vadd.f32 %v1888, %v1907
      %1909 = vdwg.mxu0
      %vm1910 = vcmp.eq.s32.totalorder %v433, 1
      %v1911 = vsel %vm1910, 1, 0
      %v1912 = vcvt.s32.f32 %v1911
      %v1914 = vperm.slane %v1912, 0
      %v1916 = vmul.f32 %v1906, %v1914
      %v1917 = vmul.f32 %v1908, %v1914
      %1918 = vadd.xlane.f32.xlu0 %v1916
      %v1919 = vpop.xlane.xlu0 %1918
      %v1920 = vsel %vm1332, %v1917, 0.0
      %1921 = vadd.xlane.f32.xlu0 %v1920
      %v1922 = vpop.xlane.xlu0 %1921
      %s1923 = scalar_lea.vmem %s430, 16
      %1924 = vst.msk [vmem:[%s1923] sm:$0xff] %vm1336, %v1919
      %1925 = vst.msk [vmem:[%s1923 + $0x8] sm:$0x1] %vm1338, %v1922
      %v1926 = vmul.f32 %v1906, %v1906
      %v1927 = vsel %vm579, %v1926, 0.0
      %v1928 = vrot.slane %v1927, 4
      %v1929 = vadd.f32 %v1927, %v1928
      %v1930 = vrot.slane %v1929, 2
      %v1931 = vadd.f32 %v1929, %v1930
      %v1932 = vrot.slane %v1931, 1
      %v1933 = vadd.f32 %v1931, %v1932
      %v1934 = vmax.f32 %v1933, 1e-12
      %v1935 = vrsqrt.pop %v1934
      %v1936 = vmul.f32 %v1935, %v1934
      %v1937 = vmul.f32 %v1936, %v1935
      %v1938 = vmul.f32 0.5, %v1937
      %v1939 = vsub.f32 1.5, %v1938
      %v1940 = vmul.f32 %v1935, %v1939
      %vm1941 = vweird.f32 %v1934
      %vm1942 = vweird.f32 %v1935
      %vm1943 = vmor %vm1941, %vm1942
      %v1944 = vsel %vm1943, %v1935, %v1940
      %v1945 = vmul.f32 %v1906, %v1944
      %v1947 = vrot.slane %v1906, 3
      %v1949 = vmul.f32 %v1945, %v1947
      %v1950 = vsel %vm579, %v1949, 0.0
      %v1951 = vrot.slane %v1950, 4
      %v1952 = vadd.f32 %v1950, %v1951
      %v1953 = vrot.slane %v1952, 2
      %v1954 = vadd.f32 %v1952, %v1953
      %v1955 = vrot.slane %v1954, 1
      %v1956 = vadd.f32 %v1954, %v1955
      %v1957 = vmul.f32 %v1956, %v1945
      %v1959 = vrot.slane %v1957, 5
      %v1961 = vsub.f32 %v1906, %v1959
      %v1962 = vmul.f32 %v1961, %v1961
      %v1964 = vrot.slane %v1962, 3
      %v1966 = vsel %vm579, %v1964, 0.0
      %v1967 = vrot.slane %v1966, 4
      %v1968 = vadd.f32 %v1966, %v1967
      %v1969 = vrot.slane %v1968, 2
      %v1970 = vadd.f32 %v1968, %v1969
      %v1971 = vrot.slane %v1970, 1
      %v1972 = vadd.f32 %v1970, %v1971
      %v1973 = vmax.f32 %v1972, 1e-12
      %v1974 = vrsqrt.pop %v1973
      %v1975 = vmul.f32 %v1974, %v1973
      %v1976 = vmul.f32 %v1975, %v1974
      %v1977 = vmul.f32 0.5, %v1976
      %v1978 = vsub.f32 1.5, %v1977
      %v1979 = vmul.f32 %v1974, %v1978
      %vm1980 = vweird.f32 %v1973
      %vm1981 = vweird.f32 %v1974
      %vm1982 = vmor %vm1980, %vm1981
      %v1983 = vsel %vm1982, %v1974, %v1979
      %v1984 = vmul.f32 %v1961, %v1983
      %s1985 = scalar_lea.vmem %s425, 16
      %1986 = vst [vmem:[%s1985] sm:$0x7] %v1945
      %1987 = vst [vmem:[%s1985] sm:$0x38] %v1984
      %v1989 = vrot.slane %v1984, 4
      %v1991 = vmul.f32 %v1945, %v1989
      %v1992 = vrot.slane %v1984, 2
      %v1994 = vmul.f32 %v1945, %v1992
      %v1996 = vrot.slane %v1994, 1
      %v1998 = vsub.f32 %v1991, %v1996
      %1999 = vst [vmem:[%s1985 + $0x5] sm:$0x2] %v1998
      %v2000 = vrot.slane %v1984, 1
      %v2002 = vmul.f32 %v1945, %v2000
      %v2003 = vrot.slane %v1984, 5
      %v2005 = vmul.f32 %v1945, %v2003
      %v2007 = vrot.slane %v2005, 6
      %v2009 = vsub.f32 %v2002, %v2007
      %2010 = vst [vmem:[%s1985 + $0x5] sm:$0x4] %v2009
      %2011 = vst [vmem:[%s1985 + $0x8] sm:$0x1] %v1998
      %p2012 = scmp.lt.s32.totalorder %s23, 1
      %s2013 = scalar_select %p2012, %s23, 1
      %s2014 = smul.addr %s2013, 4
      %s2015 = smul.addr %s2014, 8
      %s2016 = scalar_lea.vmem %s10, %s2015
      %p2017 = scmp.lt.s32.totalorder %s23, 1
      %s2018 = scalar_select %p2017, %s23, 1
      %s2019 = smul.addr %s2018, 4
      %s2020 = smul.addr %s2019, 8
      %s2021 = scalar_lea.vmem %s11, %s2020
      // Predicated region
      $region61: #{tpu_custom_call.1} parent=59 // pred_check
        %p2022 = pneg %p266
      $region62: #{tpu_custom_call.1} parent=59 // pred_check_branch
        %2024 = sbr.rel (%p2022) target = $region64
      $region63: #{tpu_custom_call.1} parent=59 // pred_region
        _
      $region64: #{tpu_custom_call.1} parent=59 // pred_fallthru
        _
      // Predicated region
      $region65: #{tpu_custom_call.1} parent=59 // pred_check
        %p2025 = pneg %p292
      $region66: #{tpu_custom_call.1} parent=59 // pred_check_branch
        %2027 = sbr.rel (%p2025) target = $region68
      $region67: #{tpu_custom_call.1} parent=59 // pred_region
        _
      $region68: #{tpu_custom_call.1} parent=59 // pred_fallthru
        _
    $region60: #{tpu_custom_call.1} parent=5 // pred_fallthru
      _
    %p2028 = scmp.le.s32.totalorder 2, %s18
    // Predicated region
    $region69: #{tpu_custom_call.1} parent=5 // pred_check
      %p2029 = pneg %p2028
    $region70: #{tpu_custom_call.1} parent=5 // pred_check_branch
      %2031 = sbr.rel (%p2029) target = $region72
    $region71: #{tpu_custom_call.1} parent=5 // pred_region
      %s2032 = ssub.s32 %s18, 2
      // Predicated region
      $region73: #{tpu_custom_call.1} parent=71 // pred_check
        %p2033 = pneg %p272
      $region74: #{tpu_custom_call.1} parent=71 // pred_check_branch
        %2035 = sbr.rel (%p2033) target = $region76
      $region75: #{tpu_custom_call.1} parent=71 // pred_region
        %p2036 = scmp.lt.s32.totalorder %s24, 1
        %s2037 = scalar_select %p2036, %s24, 1
        %s2038 = smul.addr %s2037, 4
        %s2039 = smul.addr %s2038, 8
        %s2040 = scalar_lea.vmem %s10, %s2039
      $region76: #{tpu_custom_call.1} parent=71 // pred_fallthru
        _
      // Predicated region
      $region77: #{tpu_custom_call.1} parent=71 // pred_check
        %p2041 = pneg %p298
      $region78: #{tpu_custom_call.1} parent=71 // pred_check_branch
        %2043 = sbr.rel (%p2041) target = $region80
      $region79: #{tpu_custom_call.1} parent=71 // pred_region
        %p2044 = scmp.lt.s32.totalorder %s24, 1
        %s2045 = scalar_select %p2044, %s24, 1
        %s2046 = smul.addr %s2045, 4
        %s2047 = smul.addr %s2046, 8
        %s2048 = scalar_lea.vmem %s11, %s2047
      $region80: #{tpu_custom_call.1} parent=71 // pred_fallthru
        _
    $region72: #{tpu_custom_call.1} parent=5 // pred_fallthru
      _
  $region6: #{tpu_custom_call.1} parent=0 // loop_footer
    %s22 = sadd.s32 1, %s18
  $region7: #{tpu_custom_call.1} parent=0 // loop_footer_branch
    %17 = sbr.rel target = $region3
  $region8: #{tpu_custom_call.1} parent=0 // loop_exit
    _

</llo_original>
